<compile_context>
chip_gen: v5e
topology: v5e:2x2
jax: 0.10.0
libtpu: 0.0.40
codegen_flags: <defaults>
</compile_context>

<pallas_src>
import functools
import math

import numpy as np
import jax
import jax.numpy as jnp
from jax.experimental import pallas as pl

# ------------------------- configuration -------------------------
IMG_SIZE = 32
PATCH_SIZE = 16
INNER = 4                      # HiViT inner patches (4x4 sub-patches per 16x16 patch)
IN_CHANS = 3
EMBED_DIM = 32
E4 = EMBED_DIM // 4            # 8
E8 = EMBED_DIM // 2            # 16
NUM_HEADS = 4
HEAD_DIM = EMBED_DIM // NUM_HEADS
PRED_DIM = 16
MLP_DEPTH1 = 1
MLP_DEPTH2 = 1
DEPTH = 2
BRIDGE_MLP_RATIO = 3.0
MLP_RATIO = 4.0
LN_EPS = 1e-5                  # nn.LayerNorm default
INIT_STD = 0.02
NEG_INF = -1e30

HP = IMG_SIZE // PATCH_SIZE    # 2
NUM_PATCHES = HP * HP          # 4
CONV_K = PATCH_SIZE // INNER   # 4 (conv kernel = stride)


# ------------------------- in-kernel math helpers -------------------------
def _gelu(x):
    # PyTorch nn.GELU default (erf form)
    return 0.5 * x * (1.0 + jax.lax.erf(x * (1.0 / math.sqrt(2.0))))


def _ln(x, g, b, eps=LN_EPS):
    mu = jnp.mean(x, axis=-1, keepdims=True)
    var = jnp.mean(jnp.square(x - mu), axis=-1, keepdims=True)
    return (x - mu) * jax.lax.rsqrt(var + eps) * g + b


def _mlp_residual(x, g, b, w1, b1, w2, b2):
    # x + fc2(gelu(fc1(LN(x))))
    h = _ln(x, g, b)
    h = jnp.dot(h, w1, preferred_element_type=jnp.float32) + b1
    h = _gelu(h)
    h = jnp.dot(h, w2, preferred_element_type=jnp.float32) + b2
    return x + h


# ------------------------- fused Pallas kernels -------------------------
def _stage1_kernel(*refs, n_mlp):
    """patch-embed matmul + mask-token select + bridge-stage-1 MLP blocks."""
    xc_ref, cw_ref, cb_ref, mt_ref, mk_ref = refs[:5]
    o_ref = refs[-1]
    x = jnp.dot(xc_ref[...], cw_ref[...], preferred_element_type=jnp.float32) + cb_ref[...]
    m = mk_ref[...]                                         # (rows, 1) in {0,1}
    x = x * (1.0 - m) + mt_ref[...] * m
    idx = 5
    for _ in range(n_mlp):
        g, b, w1, b1, w2, b2 = (refs[idx + j][...] for j in range(6))
        idx += 6
        x = _mlp_residual(x, g, b, w1, b1, w2, b2)
    o_ref[...] = x


def _merge_bridge_kernel(*refs, n_mlp):
    """patch-merge (LN + bias-free reduction) + bridge MLP blocks."""
    xm_ref, g_ref, b_ref, rw_ref = refs[:4]
    o_ref = refs[-1]
    h = _ln(xm_ref[...], g_ref[...], b_ref[...])
    x = jnp.dot(h, rw_ref[...], preferred_element_type=jnp.float32)   # reduction, no bias
    idx = 4
    for _ in range(n_mlp):
        g, b, w1, b1, w2, b2 = (refs[idx + j][...] for j in range(6))
        idx += 6
        x = _mlp_residual(x, g, b, w1, b1, w2, b2)
    o_ref[...] = x


def _merge_main_kernel(*refs, n_blocks, num_heads, head_dim):
    """patch-merge-2 + pos-embed + all main attention blocks + final LN + lm_head."""
    xm_ref, mg_ref, mb_ref, rw_ref, pos_ref, bias_ref = refs[:6]
    o_ref = refs[-1]

    h = _ln(xm_ref[...], mg_ref[...], mb_ref[...])
    x = jnp.dot(h, rw_ref[...], preferred_element_type=jnp.float32)   # reduction, no bias
    x = x + pos_ref[...]                                               # abs pos embed

    attn_bias = bias_ref[...]                  # (B*N, B*N) batch block-diag: 0 / -1e30
    scale = head_dim ** -0.5
    d_model = num_heads * head_dim

    idx = 6
    for _ in range(n_blocks):
        (ln1_g, ln1_b, qkv_w, qkv_b, proj_w, proj_b,
         ln2_g, ln2_b, fc1_w, fc1_b, fc2_w, fc2_b) = (refs[idx + j][...] for j in range(12))
        idx += 12

        # ---- attention sub-block (all batches at once via additive block mask) ----
        hln = _ln(x, ln1_g, ln1_b)
        qkv = jnp.dot(hln, qkv_w, preferred_element_type=jnp.float32) + qkv_b  # (B*N, 3D)
        attn_out = None
        for hh in range(num_heads):
            lo = hh * head_dim
            q = qkv[:, lo:lo + head_dim] * scale
            k = qkv[:, d_model + lo:d_model + lo + head_dim]
            v = qkv[:, 2 * d_model + lo:2 * d_model + lo + head_dim]
            # q @ k^T without materializing the transpose
            s = jax.lax.dot_general(q, k, (((1,), (1,)), ((), ())),
                                    preferred_element_type=jnp.float32)
            s = s + attn_bias
            s = s - jnp.max(s, axis=-1, keepdims=True)
            p = jnp.exp(s)
            p = p * pl.reciprocal(jnp.sum(p, axis=-1, keepdims=True), approx=True)
            oh = jnp.dot(p, v, preferred_element_type=jnp.float32)            # (B*N, d)
            contrib = jnp.dot(oh, proj_w[lo:lo + head_dim, :],
                              preferred_element_type=jnp.float32)             # (B*N, D)
            attn_out = contrib if attn_out is None else attn_out + contrib
        x = x + attn_out + proj_b

        # ---- MLP sub-block ----
        x = _mlp_residual(x, ln2_g, ln2_b, fc1_w, fc1_b, fc2_w, fc2_b)

    norm_g, norm_b, lm_w, lm_b = (refs[idx + j][...] for j in range(4))
    h = _ln(x, norm_g, norm_b)
    o_ref[...] = jnp.dot(h, lm_w, preferred_element_type=jnp.float32) + lm_b


# ------------------------- pallas_call wrappers -------------------------
def _mlp_block_inputs(p):
    return [p["ln2_g"].reshape(1, -1), p["ln2_b"].reshape(1, -1),
            p["fc1_w"], p["fc1_b"].reshape(1, -1),
            p["fc2_w"], p["fc2_b"].reshape(1, -1)]


def stage1(xcols, conv_w2d, conv_b, mt_rows, mask_rows, blocks):
    inputs = [xcols, conv_w2d, conv_b.reshape(1, -1), mt_rows, mask_rows]
    for p in blocks:
        inputs += _mlp_block_inputs(p)
    M = xcols.shape[0]
    D = conv_w2d.shape[1]
    return pl.pallas_call(
        functools.partial(_stage1_kernel, n_mlp=len(blocks)),
        out_shape=jax.ShapeDtypeStruct((M, D), jnp.float32),
    )(*inputs)


def merge_bridge(xm, merge_p, blocks):
    inputs = [xm, merge_p["ln_g"].reshape(1, -1), merge_p["ln_b"].reshape(1, -1),
              merge_p["red_w"]]
    for p in blocks:
        inputs += _mlp_block_inputs(p)
    M = xm.shape[0]
    Dout = merge_p["red_w"].shape[1]
    return pl.pallas_call(
        functools.partial(_merge_bridge_kernel, n_mlp=len(blocks)),
        out_shape=jax.ShapeDtypeStruct((M, Dout), jnp.float32),
    )(*inputs)


def merge_main(xm, merge_p, pos, attn_bias, blocks, norm_g, norm_b, lm_w, lm_b):
    inputs = [xm, merge_p["ln_g"].reshape(1, -1), merge_p["ln_b"].reshape(1, -1),
              merge_p["red_w"], pos, attn_bias]
    for p in blocks:
        inputs += [p["ln1_g"].reshape(1, -1), p["ln1_b"].reshape(1, -1),
                   p["qkv_w"], p["qkv_b"].reshape(1, -1),
                   p["proj_w"], p["proj_b"].reshape(1, -1),
                   p["ln2_g"].reshape(1, -1), p["ln2_b"].reshape(1, -1),
                   p["fc1_w"], p["fc1_b"].reshape(1, -1),
                   p["fc2_w"], p["fc2_b"].reshape(1, -1)]
    inputs += [norm_g.reshape(1, -1), norm_b.reshape(1, -1), lm_w, lm_b.reshape(1, -1)]
    M = xm.shape[0]
    return pl.pallas_call(
        functools.partial(_merge_main_kernel, n_blocks=len(blocks),
                          num_heads=NUM_HEADS, head_dim=HEAD_DIM),
        out_shape=jax.ShapeDtypeStruct((M, PRED_DIM), jnp.float32),
    )(*inputs)


# ------------------------- plain-JAX glue (pure data movement) -------------
def _merge_reorg(x5):
    # x5: (B, P, h, w, D) -> (B, P, h/2, w/2, 4*D), HiViT PatchMerge order
    x0 = x5[..., 0::2, 0::2, :]
    x1 = x5[..., 1::2, 0::2, :]
    x2 = x5[..., 0::2, 1::2, :]
    x3 = x5[..., 1::2, 1::2, :]
    return jnp.concatenate([x0, x1, x2, x3], axis=-1)


def forward(params, x_nchw, bool_masked_pos_np):
    B, C, H, W = x_nchw.shape
    Hp, Wp = H // PATCH_SIZE, W // PATCH_SIZE
    P = Hp * Wp

    # im2col for the 4x4 / stride-4 conv, directly in HiViT token order
    # rows: (b, hp, wp, ii, ij)   cols: (c, kh, kw)
    xr = x_nchw.reshape(B, C, Hp, INNER, CONV_K, Wp, INNER, CONV_K)
    xr = xr.transpose(0, 2, 5, 3, 6, 1, 4, 7)
    xcols = xr.reshape(B * P * INNER * INNER, C * CONV_K * CONV_K)      # (128, 48)

    conv_w2d = params["conv_w"].reshape(E4, C * CONV_K * CONV_K).T      # (48, 8)
    mt_rows = jnp.tile(params["mask_token"].reshape(INNER * INNER, E4), (B * P, 1))
    mask_rows = jnp.repeat(
        jnp.asarray(bool_masked_pos_np).reshape(B * P).astype(jnp.float32),
        INNER * INNER).reshape(B * P * INNER * INNER, 1)

    # --- kernel 1: patch embed + mask token + bridge stage 1 ---
    y = stage1(xcols, conv_w2d, params["conv_b"], mt_rows, mask_rows,
               params["bridge1"])                                       # (128, E4)

    # --- patch merge 1 reorg (glue) + kernel 2: merge1 + bridge stage 2 ---
    y5 = y.reshape(B, P, INNER, INNER, E4)
    ym = _merge_reorg(y5)                                               # (B, P, 2, 2, 4*E4)
    y = merge_bridge(ym.reshape(-1, 4 * E4), params["merge1"],
                     params["bridge2"])                                 # (32, E8)

    # --- patch merge 2 reorg (glue) ---
    y5 = y.reshape(B, P, INNER // 2, INNER // 2, E8)
    ym = _merge_reorg(y5)                                               # (B, P, 1, 1, 4*E8)
    xm = ym.reshape(B * P, 4 * E8)                                      # (8, 64)

    # pos embed (interpolate_pos_encoding returns pos_embed: npatch==N, h==w)
    pos = jnp.tile(params["pos_embed"].reshape(P, EMBED_DIM), (B, 1))   # (B*P, D)
    # batch block-diagonal additive mask so all batches run in one attention block
    row_b = np.repeat(np.arange(B), P)
    attn_bias = jnp.asarray(
        np.where(row_b[:, None] == row_b[None, :], 0.0, NEG_INF), jnp.float32)

    # --- kernel 3: merge2 + pos + main blocks + final LN + lm_head ---
    out_all = merge_main(xm, params["merge2"], pos, attn_bias, params["main_blocks"],
                         params["norm_g"], params["norm_b"],
                         params["lm_head_w"], params["lm_head_b"])      # (B*P, PRED)

    # x[bool_masked_pos] gather (mask is static -> numpy indexing)
    idx = np.nonzero(np.asarray(bool_masked_pos_np).reshape(-1))[0]
    return out_all[idx]


# ------------------------- deterministic parameter init -------------------
def init_params(key):
    keys = iter(jax.random.split(key, 256))

    def tn(shape, std=INIT_STD):
        # trunc_normal_(std=s, a=-s, b=s)
        return std * jax.random.truncated_normal(next(keys), -1.0, 1.0, shape, jnp.float32)

    def mlp_params(dim, ratio):
        hid = int(dim * ratio)
        return {"ln2_g": jnp.ones((dim,), jnp.float32),
                "ln2_b": jnp.zeros((dim,), jnp.float32),
                "fc1_w": tn((dim, hid)), "fc1_b": jnp.zeros((hid,), jnp.float32),
                "fc2_w": tn((hid, dim)), "fc2_b": jnp.zeros((dim,), jnp.float32)}

    def merge_params(dim):
        return {"ln_g": jnp.ones((dim * 4,), jnp.float32),
                "ln_b": jnp.zeros((dim * 4,), jnp.float32),
                "red_w": tn((dim * 4, dim * 2))}

    def main_params(dim):
        hid = int(dim * MLP_RATIO)
        # q_bias / v_bias are zero-initialized Parameters, k-bias is fixed zero
        # (all zero at init; if trained weights are loaded the k slot must stay 0).
        qkv_b = jnp.zeros((3 * dim,), jnp.float32)
        p = {"ln1_g": jnp.ones((dim,), jnp.float32), "ln1_b": jnp.zeros((dim,), jnp.float32),
             "qkv_w": tn((dim, 3 * dim)), "qkv_b": qkv_b,
             "proj_w": tn((dim, dim)), "proj_b": jnp.zeros((dim,), jnp.float32)}
        p.update(mlp_params(dim, MLP_RATIO))
        p["fc1_w"] = tn((dim, hid))
        p["fc2_w"] = tn((hid, dim))
        return p

    params = {
        "conv_w": tn((E4, IN_CHANS, CONV_K, CONV_K)),
        "conv_b": jnp.zeros((E4,), jnp.float32),
        "mask_token": tn((1, 1, EMBED_DIM * 4)),
        "pos_embed": tn((1, NUM_PATCHES, EMBED_DIM)),
        "bridge1": [mlp_params(E4, BRIDGE_MLP_RATIO) for _ in range(MLP_DEPTH1)],
        "merge1": merge_params(E4),
        "bridge2": [mlp_params(E8, BRIDGE_MLP_RATIO) for _ in range(MLP_DEPTH2)],
        "merge2": merge_params(E8),
        "main_blocks": [main_params(EMBED_DIM) for _ in range(DEPTH)],
        "norm_g": jnp.ones((EMBED_DIM,), jnp.float32),
        "norm_b": jnp.zeros((EMBED_DIM,), jnp.float32),
        "lm_head_w": tn((EMBED_DIM, PRED_DIM)),
        "lm_head_b": jnp.zeros((PRED_DIM,), jnp.float32),
    }

    # fix_init_weight(): rescale attn.proj / mlp.fc2 by 1/sqrt(2*layer_id), skipping merges
    layer_id = 0
    for p in params["bridge1"]:
        layer_id += 1
        p["fc2_w"] = p["fc2_w"] / math.sqrt(2.0 * layer_id)
    layer_id += 1  # merge1 (skipped but enumerated)
    for p in params["bridge2"]:
        layer_id += 1
        p["fc2_w"] = p["fc2_w"] / math.sqrt(2.0 * layer_id)
    layer_id += 1  # merge2
    for p in params["main_blocks"]:
        layer_id += 1
        p["proj_w"] = p["proj_w"] / math.sqrt(2.0 * layer_id)
        p["fc2_w"] = p["fc2_w"] / math.sqrt(2.0 * layer_id)
    return params


# ------------------------- main -------------------------
if __name__ == "__main__":
    B = 2
    x = jax.random.normal(jax.random.PRNGKey(0), (B, IN_CHANS, IMG_SIZE, IMG_SIZE), jnp.float32)
    # bool_masked_pos: (B, num_patches) boolean mask of patches to predict
    bool_masked_pos = np.array([[True, False, True, False],
                                [False, True, False, True]], dtype=bool)

    params = init_params(jax.random.PRNGKey(1))
    out = forward(params, x, bool_masked_pos)
    out = jax.block_until_ready(out)

    num_masked = int(bool_masked_pos.sum())
    assert out.shape == (num_masked, PRED_DIM), out.shape
    assert bool(jnp.all(jnp.isfinite(out)))
    print("KERNEL_OK")
</pallas_src>

<mosaic_0001>
module attributes {stable_mosaic.version = 11 : i64} {
  func.func @_stage1_kernel(%arg0: memref<128x48xf32, #tpu.memory_space<vmem>>, %arg1: memref<48x8xf32, #tpu.memory_space<vmem>>, %arg2: memref<1x8xf32, #tpu.memory_space<vmem>>, %arg3: memref<128x8xf32, #tpu.memory_space<vmem>>, %arg4: memref<128x1xf32, #tpu.memory_space<vmem>>, %arg5: memref<1x8xf32, #tpu.memory_space<vmem>>, %arg6: memref<1x8xf32, #tpu.memory_space<vmem>>, %arg7: memref<8x24xf32, #tpu.memory_space<vmem>>, %arg8: memref<1x24xf32, #tpu.memory_space<vmem>>, %arg9: memref<24x8xf32, #tpu.memory_space<vmem>>, %arg10: memref<1x8xf32, #tpu.memory_space<vmem>>, %arg11: memref<128x8xf32, #tpu.memory_space<vmem>>) attributes {dimension_semantics = [], scalar_prefetch = 0 : i64, scratch_operands = 0 : i64, tpu.core_type = #tpu.core_type<tc>} {
    %c0 = arith.constant 0 : index
    %c0_0 = arith.constant 0 : index
    %0 = vector.load %arg0[%c0, %c0_0] : memref<128x48xf32, #tpu.memory_space<vmem>>, vector<128x48xf32>
    %c0_1 = arith.constant 0 : index
    %c0_2 = arith.constant 0 : index
    %1 = vector.load %arg1[%c0_1, %c0_2] : memref<48x8xf32, #tpu.memory_space<vmem>>, vector<48x8xf32>
    %cst = arith.constant dense<0.000000e+00> : vector<128x8xf32>
    %2 = tpu.matmul %0, %1, %cst {dimension_numbers = #tpu.dot_dimension_numbers<[1], [0], [0], [1], [0, 0, 1, 1], [], []>} : vector<128x48xf32>, vector<48x8xf32>, vector<128x8xf32> -> vector<128x8xf32>
    %c0_3 = arith.constant 0 : index
    %c0_4 = arith.constant 0 : index
    %3 = vector.load %arg2[%c0_3, %c0_4] : memref<1x8xf32, #tpu.memory_space<vmem>>, vector<1x8xf32>
    %4 = vector.broadcast %3 : vector<1x8xf32> to vector<128x8xf32>
    %5 = arith.addf %2, %4 : vector<128x8xf32>
    %c0_5 = arith.constant 0 : index
    %c0_6 = arith.constant 0 : index
    %6 = vector.load %arg4[%c0_5, %c0_6] : memref<128x1xf32, #tpu.memory_space<vmem>>, vector<128x1xf32>
    %cst_7 = arith.constant 1.000000e+00 : f32
    %7 = vector.broadcast %cst_7 : f32 to vector<128x1xf32>
    %8 = arith.subf %7, %6 : vector<128x1xf32>
    %9 = vector.broadcast %8 : vector<128x1xf32> to vector<128x8xf32>
    %10 = arith.mulf %5, %9 : vector<128x8xf32>
    %c0_8 = arith.constant 0 : index
    %c0_9 = arith.constant 0 : index
    %11 = vector.load %arg3[%c0_8, %c0_9] : memref<128x8xf32, #tpu.memory_space<vmem>>, vector<128x8xf32>
    %12 = vector.broadcast %6 : vector<128x1xf32> to vector<128x8xf32>
    %13 = arith.mulf %11, %12 : vector<128x8xf32>
    %14 = arith.addf %10, %13 : vector<128x8xf32>
    %c0_10 = arith.constant 0 : index
    %c0_11 = arith.constant 0 : index
    %15 = vector.load %arg5[%c0_10, %c0_11] : memref<1x8xf32, #tpu.memory_space<vmem>>, vector<1x8xf32>
    %c0_12 = arith.constant 0 : index
    %c0_13 = arith.constant 0 : index
    %16 = vector.load %arg6[%c0_12, %c0_13] : memref<1x8xf32, #tpu.memory_space<vmem>>, vector<1x8xf32>
    %c0_14 = arith.constant 0 : index
    %c0_15 = arith.constant 0 : index
    %17 = vector.load %arg7[%c0_14, %c0_15] : memref<8x24xf32, #tpu.memory_space<vmem>>, vector<8x24xf32>
    %c0_16 = arith.constant 0 : index
    %c0_17 = arith.constant 0 : index
    %18 = vector.load %arg8[%c0_16, %c0_17] : memref<1x24xf32, #tpu.memory_space<vmem>>, vector<1x24xf32>
    %c0_18 = arith.constant 0 : index
    %c0_19 = arith.constant 0 : index
    %19 = vector.load %arg9[%c0_18, %c0_19] : memref<24x8xf32, #tpu.memory_space<vmem>>, vector<24x8xf32>
    %c0_20 = arith.constant 0 : index
    %c0_21 = arith.constant 0 : index
    %20 = vector.load %arg10[%c0_20, %c0_21] : memref<1x8xf32, #tpu.memory_space<vmem>>, vector<1x8xf32>
    %cst_22 = arith.constant dense<0.000000e+00> : vector<128xf32>
    %21 = vector.multi_reduction <add>, %14, %cst_22 [1] : vector<128x8xf32> to vector<128xf32>
    %22 = vector.shape_cast %21 : vector<128xf32> to vector<128x1xf32>
    %cst_23 = arith.constant 8.000000e+00 : f32
    %23 = vector.broadcast %cst_23 : f32 to vector<128x1xf32>
    %24 = arith.divf %22, %23 : vector<128x1xf32>
    %25 = vector.broadcast %24 : vector<128x1xf32> to vector<128x8xf32>
    %26 = arith.subf %14, %25 : vector<128x8xf32>
    %27 = arith.mulf %26, %26 : vector<128x8xf32>
    %cst_24 = arith.constant dense<0.000000e+00> : vector<128xf32>
    %28 = vector.multi_reduction <add>, %27, %cst_24 [1] : vector<128x8xf32> to vector<128xf32>
    %29 = vector.shape_cast %28 : vector<128xf32> to vector<128x1xf32>
    %cst_25 = arith.constant 8.000000e+00 : f32
    %30 = vector.broadcast %cst_25 : f32 to vector<128x1xf32>
    %31 = arith.divf %29, %30 : vector<128x1xf32>
    %32 = vector.broadcast %24 : vector<128x1xf32> to vector<128x8xf32>
    %33 = arith.subf %14, %32 : vector<128x8xf32>
    %cst_26 = arith.constant 9.99999974E-6 : f32
    %34 = vector.broadcast %cst_26 : f32 to vector<128x1xf32>
    %35 = arith.addf %31, %34 : vector<128x1xf32>
    %36 = math.rsqrt %35 : vector<128x1xf32>
    %37 = vector.broadcast %36 : vector<128x1xf32> to vector<128x8xf32>
    %38 = arith.mulf %33, %37 : vector<128x8xf32>
    %39 = vector.broadcast %15 : vector<1x8xf32> to vector<128x8xf32>
    %40 = arith.mulf %38, %39 : vector<128x8xf32>
    %41 = vector.broadcast %16 : vector<1x8xf32> to vector<128x8xf32>
    %42 = arith.addf %40, %41 : vector<128x8xf32>
    %cst_27 = arith.constant dense<0.000000e+00> : vector<128x24xf32>
    %43 = tpu.matmul %42, %17, %cst_27 {dimension_numbers = #tpu.dot_dimension_numbers<[1], [0], [0], [1], [0, 0, 1, 1], [], []>} : vector<128x8xf32>, vector<8x24xf32>, vector<128x24xf32> -> vector<128x24xf32>
    %44 = vector.broadcast %18 : vector<1x24xf32> to vector<128x24xf32>
    %45 = arith.addf %43, %44 : vector<128x24xf32>
    %cst_28 = arith.constant 5.000000e-01 : f32
    %46 = vector.broadcast %cst_28 : f32 to vector<128x24xf32>
    %47 = arith.mulf %46, %45 : vector<128x24xf32>
    %cst_29 = arith.constant 0.707106769 : f32
    %48 = vector.broadcast %cst_29 : f32 to vector<128x24xf32>
    %49 = arith.mulf %45, %48 : vector<128x24xf32>
    %50 = math.erf %49 : vector<128x24xf32>
    %cst_30 = arith.constant 1.000000e+00 : f32
    %51 = vector.broadcast %cst_30 : f32 to vector<128x24xf32>
    %52 = arith.addf %51, %50 : vector<128x24xf32>
    %53 = arith.mulf %47, %52 : vector<128x24xf32>
    %cst_31 = arith.constant dense<0.000000e+00> : vector<128x8xf32>
    %54 = tpu.matmul %53, %19, %cst_31 {dimension_numbers = #tpu.dot_dimension_numbers<[1], [0], [0], [1], [0, 0, 1, 1], [], []>} : vector<128x24xf32>, vector<24x8xf32>, vector<128x8xf32> -> vector<128x8xf32>
    %55 = vector.broadcast %20 : vector<1x8xf32> to vector<128x8xf32>
    %56 = arith.addf %54, %55 : vector<128x8xf32>
    %57 = arith.addf %14, %56 : vector<128x8xf32>
    %c0_32 = arith.constant 0 : index
    %c0_33 = arith.constant 0 : index
    %58 = vector.load %arg11[%c0_32, %c0_33] : memref<128x8xf32, #tpu.memory_space<vmem>>, vector<128x8xf32>
    tpu.vector_store %arg11[%c0_32, %c0_33], %57 {strides = array<i32>} : memref<128x8xf32, #tpu.memory_space<vmem>>, vector<128x8xf32>,
    return
  }
}

</mosaic_0001>

<llo_original>
// kernel: tpu_custom_call.1
$region0: #{tpu_custom_call.1}
  #allocation0 [shape = 'u32[]', space=smem, size = 0x4, offset = 0x4, fixed_abs, tag = 'smem constant byte address 0x4 - core index']
  #allocation1 [shape = 'u32[72,128]{1,0:T(1,128)}', space=vmem, size = 0x9000, scoped, tag = 'internal scratch']
  %s0 = inlined_call_operand.vmem [shape: f32[128,48], index: 0, kind: input, shape index: {}]
  %s1 = inlined_call_operand.vmem [shape: f32[48,8], index: 1, kind: input, shape index: {}]
  %s2 = inlined_call_operand.vmem [shape: f32[1,8], index: 2, kind: input, shape index: {}]
  %s3 = inlined_call_operand.vmem [shape: f32[128,8], index: 3, kind: input, shape index: {}]
  %s4 = inlined_call_operand.vmem [shape: f32[128,1], index: 4, kind: input, shape index: {}]
  %s5 = inlined_call_operand.vmem [shape: f32[1,8], index: 5, kind: input, shape index: {}]
  %s6 = inlined_call_operand.vmem [shape: f32[1,8], index: 6, kind: input, shape index: {}]
  %s7 = inlined_call_operand.vmem [shape: f32[8,24], index: 7, kind: input, shape index: {}]
  %s8 = inlined_call_operand.vmem [shape: f32[1,24], index: 8, kind: input, shape index: {}]
  %s9 = inlined_call_operand.vmem [shape: f32[24,8], index: 9, kind: input, shape index: {}]
  %s10 = inlined_call_operand.vmem [shape: f32[1,8], index: 10, kind: input, shape index: {}]
  %s11 = inlined_call_operand.vmem [shape: f32[128,8], index: 11, kind: output, shape index: {}]
  %s12 = sld [smem:[#allocation0]]
  $region54: #{tpu_custom_call.1} parent=0
    _
  %s14 = ssub.s32 1, %s12
  %s15 = scalar_select 0, %s14, %s12
  // Predicated region
  $region2: #{tpu_custom_call.1} parent=0 // pred_check
    _
  $region3: #{tpu_custom_call.1} parent=0 // pred_check_branch
    %17 = sbr.rel (0) target = $region5
  $region4: #{tpu_custom_call.1} parent=0 // pred_region
    _
  $region5: #{tpu_custom_call.1} parent=0 // pred_fallthru
    _
  // Predicated region
  $region6: #{tpu_custom_call.1} parent=0 // pred_check
    _
  $region7: #{tpu_custom_call.1} parent=0 // pred_check_branch
    %19 = sbr.rel (0) target = $region9
  $region8: #{tpu_custom_call.1} parent=0 // pred_region
    _
  $region9: #{tpu_custom_call.1} parent=0 // pred_fallthru
    _
  // Predicated region
  $region10: #{tpu_custom_call.1} parent=0 // pred_check
    _
  $region11: #{tpu_custom_call.1} parent=0 // pred_check_branch
    %21 = sbr.rel (0) target = $region13
  $region12: #{tpu_custom_call.1} parent=0 // pred_region
    _
  $region13: #{tpu_custom_call.1} parent=0 // pred_fallthru
    _
  // Predicated region
  $region14: #{tpu_custom_call.1} parent=0 // pred_check
    _
  $region15: #{tpu_custom_call.1} parent=0 // pred_check_branch
    %23 = sbr.rel (0) target = $region17
  $region16: #{tpu_custom_call.1} parent=0 // pred_region
    _
  $region17: #{tpu_custom_call.1} parent=0 // pred_fallthru
    _
  // Predicated region
  $region18: #{tpu_custom_call.1} parent=0 // pred_check
    _
  $region19: #{tpu_custom_call.1} parent=0 // pred_check_branch
    %25 = sbr.rel (0) target = $region21
  $region20: #{tpu_custom_call.1} parent=0 // pred_region
    _
  $region21: #{tpu_custom_call.1} parent=0 // pred_fallthru
    _
  // Predicated region
  $region22: #{tpu_custom_call.1} parent=0 // pred_check
    _
  $region23: #{tpu_custom_call.1} parent=0 // pred_check_branch
    %27 = sbr.rel (0) target = $region25
  $region24: #{tpu_custom_call.1} parent=0 // pred_region
    _
  $region25: #{tpu_custom_call.1} parent=0 // pred_fallthru
    _
  // Predicated region
  $region26: #{tpu_custom_call.1} parent=0 // pred_check
    _
  $region27: #{tpu_custom_call.1} parent=0 // pred_check_branch
    %29 = sbr.rel (0) target = $region29
  $region28: #{tpu_custom_call.1} parent=0 // pred_region
    _
  $region29: #{tpu_custom_call.1} parent=0 // pred_fallthru
    _
  // Predicated region
  $region30: #{tpu_custom_call.1} parent=0 // pred_check
    _
  $region31: #{tpu_custom_call.1} parent=0 // pred_check_branch
    %31 = sbr.rel (0) target = $region33
  $region32: #{tpu_custom_call.1} parent=0 // pred_region
    _
  $region33: #{tpu_custom_call.1} parent=0 // pred_fallthru
    _
  // Predicated region
  $region34: #{tpu_custom_call.1} parent=0 // pred_check
    _
  $region35: #{tpu_custom_call.1} parent=0 // pred_check_branch
    %33 = sbr.rel (0) target = $region37
  $region36: #{tpu_custom_call.1} parent=0 // pred_region
    _
  $region37: #{tpu_custom_call.1} parent=0 // pred_fallthru
    _
  // Predicated region
  $region38: #{tpu_custom_call.1} parent=0 // pred_check
    _
  $region39: #{tpu_custom_call.1} parent=0 // pred_check_branch
    %35 = sbr.rel (0) target = $region41
  $region40: #{tpu_custom_call.1} parent=0 // pred_region
    _
  $region41: #{tpu_custom_call.1} parent=0 // pred_fallthru
    _
  // Predicated region
  $region42: #{tpu_custom_call.1} parent=0 // pred_check
    _
  $region43: #{tpu_custom_call.1} parent=0 // pred_check_branch
    %37 = sbr.rel (0) target = $region45
  $region44: #{tpu_custom_call.1} parent=0 // pred_region
    _
  $region45: #{tpu_custom_call.1} parent=0 // pred_fallthru
    _
  %v38 = vld [vmem:[%s0] sm:$0xff]
  %v39 = vld [vmem:[%s0 + $0x8] sm:$0xff]
  %v40 = vld [vmem:[%s0 + $0x10] sm:$0xff]
  %v41 = vld [vmem:[%s0 + $0x18] sm:$0xff]
  %v42 = vld [vmem:[%s0 + $0x20] sm:$0xff]
  %v43 = vld [vmem:[%s0 + $0x28] sm:$0xff]
  %v44 = vld [vmem:[%s0 + $0x30] sm:$0xff]
  %v45 = vld [vmem:[%s0 + $0x38] sm:$0xff]
  %v46 = vld [vmem:[%s0 + $0x40] sm:$0xff]
  %v47 = vld [vmem:[%s0 + $0x48] sm:$0xff]
  %v48 = vld [vmem:[%s0 + $0x50] sm:$0xff]
  %v49 = vld [vmem:[%s0 + $0x58] sm:$0xff]
  %v50 = vld [vmem:[%s0 + $0x60] sm:$0xff]
  %v51 = vld [vmem:[%s0 + $0x68] sm:$0xff]
  %v52 = vld [vmem:[%s0 + $0x70] sm:$0xff]
  %v53 = vld [vmem:[%s0 + $0x78] sm:$0xff]
  %v54 = vld [vmem:[%s1] sm:$0xff]
  %v55 = vld [vmem:[%s1 + $0x8] sm:$0xff]
  %v56 = vld [vmem:[%s1 + $0x10] sm:$0xff]
  %v57 = vld [vmem:[%s1 + $0x18] sm:$0xff]
  %v58 = vld [vmem:[%s1 + $0x20] sm:$0xff]
  %v59 = vld [vmem:[%s1 + $0x28] sm:$0xff]
  %v60 = vld [vmem:[%s2] sm:$0x1]
  %v62 = vperm.slane %v60, 0
  %vm64 = vcmask 392192
  %v66 = vsel %vm64, %v38, 0
  %v69 = vsel %vm64, %v39, 0
  %v72 = vsel %vm64, %v40, 0
  %v75 = vsel %vm64, %v41, 0
  %v78 = vsel %vm64, %v42, 0
  %v81 = vsel %vm64, %v43, 0
  %v84 = vsel %vm64, %v44, 0
  %v87 = vsel %vm64, %v45, 0
  %v90 = vsel %vm64, %v46, 0
  %v93 = vsel %vm64, %v47, 0
  %v96 = vsel %vm64, %v48, 0
  %v99 = vsel %vm64, %v49, 0
  %v102 = vsel %vm64, %v50, 0
  %v105 = vsel %vm64, %v51, 0
  %v108 = vsel %vm64, %v52, 0
  %v111 = vsel %vm64, %v53, 0
  %113 = vmatpush.msra.mxu0 0.0
  %114 = vmatpush.msra.mxu0 0.0
  %115 = vmatpush.msra.mxu0 0.0
  %116 = vmatpush.msra.mxu0 0.0
  %117 = vmatpush.msra.mxu0 0.0
  %118 = vmatpush.msra.mxu0 0.0
  %119 = vmatpush.msra.mxu0 0.0
  %120 = vmatpush.msra.mxu0 0.0
  %121 = vmatpush.msra.mxu0 0.0
  %122 = vmatpush.msra.mxu0 0.0
  %123 = vmatpush.msra.mxu0 %v59
  %124 = vmatpush.msra.mxu0 %v58
  %125 = vmatpush.msra.mxu0 %v57
  %126 = vmatpush.msra.mxu0 %v56
  %127 = vmatpush.msra.mxu0 %v55
  %128 = vmatpush.msra.mxu0 %v54
  %129 = vmatmul.f32.gmra.mxu0 %v66
  %v130 = vpop.f32.mrf.mxu0
  %v131 = vadd.f32 %v62, %v130
  %132 = vmatmul.f32.gmra.mxu0 %v69
  %v133 = vpop.f32.mrf.mxu0
  %v134 = vadd.f32 %v62, %v133
  %135 = vmatmul.f32.gmra.mxu0 %v72
  %v136 = vpop.f32.mrf.mxu0
  %v137 = vadd.f32 %v62, %v136
  %138 = vmatmul.f32.gmra.mxu0 %v75
  %v139 = vpop.f32.mrf.mxu0
  %v140 = vadd.f32 %v62, %v139
  %141 = vmatmul.f32.gmra.mxu0 %v78
  %v142 = vpop.f32.mrf.mxu0
  %v143 = vadd.f32 %v62, %v142
  %144 = vmatmul.f32.gmra.mxu0 %v81
  %v145 = vpop.f32.mrf.mxu0
  %v146 = vadd.f32 %v62, %v145
  %147 = vmatmul.f32.gmra.mxu0 %v84
  %v148 = vpop.f32.mrf.mxu0
  %v149 = vadd.f32 %v62, %v148
  %150 = vmatmul.f32.gmra.mxu0 %v87
  %v151 = vpop.f32.mrf.mxu0
  %v152 = vadd.f32 %v62, %v151
  %153 = vmatmul.f32.gmra.mxu0 %v90
  %v154 = vpop.f32.mrf.mxu0
  %v155 = vadd.f32 %v62, %v154
  %156 = vmatmul.f32.gmra.mxu0 %v93
  %v157 = vpop.f32.mrf.mxu0
  %v158 = vadd.f32 %v62, %v157
  %159 = vmatmul.f32.gmra.mxu0 %v96
  %v160 = vpop.f32.mrf.mxu0
  %v161 = vadd.f32 %v62, %v160
  %162 = vmatmul.f32.gmra.mxu0 %v99
  %v163 = vpop.f32.mrf.mxu0
  %v164 = vadd.f32 %v62, %v163
  %165 = vmatmul.f32.gmra.mxu0 %v102
  %v166 = vpop.f32.mrf.mxu0
  %v167 = vadd.f32 %v62, %v166
  %168 = vmatmul.f32.gmra.mxu0 %v105
  %v169 = vpop.f32.mrf.mxu0
  %v170 = vadd.f32 %v62, %v169
  %171 = vmatmul.f32.gmra.mxu0 %v108
  %v172 = vpop.f32.mrf.mxu0
  %v173 = vadd.f32 %v62, %v172
  %174 = vmatmul.f32.gmra.mxu0 %v111
  %v175 = vpop.f32.mrf.mxu0
  %v176 = vadd.f32 %v62, %v175
  %177 = vdwg.mxu0
  %v178 = vld [vmem:[%s4] sm:$0xff]
  %v179 = vld [vmem:[%s4 + $0x8] sm:$0xff]
  %v180 = vld [vmem:[%s4 + $0x10] sm:$0xff]
  %v181 = vld [vmem:[%s4 + $0x18] sm:$0xff]
  %v182 = vld [vmem:[%s4 + $0x20] sm:$0xff]
  %v183 = vld [vmem:[%s4 + $0x28] sm:$0xff]
  %v184 = vld [vmem:[%s4 + $0x30] sm:$0xff]
  %v185 = vld [vmem:[%s4 + $0x38] sm:$0xff]
  %v186 = vld [vmem:[%s4 + $0x40] sm:$0xff]
  %v187 = vld [vmem:[%s4 + $0x48] sm:$0xff]
  %v188 = vld [vmem:[%s4 + $0x50] sm:$0xff]
  %v189 = vld [vmem:[%s4 + $0x58] sm:$0xff]
  %v190 = vld [vmem:[%s4 + $0x60] sm:$0xff]
  %v191 = vld [vmem:[%s4 + $0x68] sm:$0xff]
  %v192 = vld [vmem:[%s4 + $0x70] sm:$0xff]
  %v193 = vld [vmem:[%s4 + $0x78] sm:$0xff]
  %v194 = vsub.f32 1.0, %v178
  %v195 = vsub.f32 1.0, %v179
  %v196 = vsub.f32 1.0, %v180
  %v197 = vsub.f32 1.0, %v181
  %v198 = vsub.f32 1.0, %v182
  %v199 = vsub.f32 1.0, %v183
  %v200 = vsub.f32 1.0, %v184
  %v201 = vsub.f32 1.0, %v185
  %v202 = vsub.f32 1.0, %v186
  %v203 = vsub.f32 1.0, %v187
  %v204 = vsub.f32 1.0, %v188
  %v205 = vsub.f32 1.0, %v189
  %v206 = vsub.f32 1.0, %v190
  %v207 = vsub.f32 1.0, %v191
  %v208 = vsub.f32 1.0, %v192
  %v209 = vsub.f32 1.0, %v193
  %211 = vset.pattern.permute.xlu0 0
  %212 = vperm.xlu0 %211, %v194
  %v213 = vpop.permute.xlu0 %212
  %216 = vset.pattern.permute.xlu0 0
  %217 = vperm.xlu0 %216, %v195
  %v218 = vpop.permute.xlu0 %217
  %221 = vset.pattern.permute.xlu0 0
  %222 = vperm.xlu0 %221, %v196
  %v223 = vpop.permute.xlu0 %222
  %226 = vset.pattern.permute.xlu0 0
  %227 = vperm.xlu0 %226, %v197
  %v228 = vpop.permute.xlu0 %227
  %231 = vset.pattern.permute.xlu0 0
  %232 = vperm.xlu0 %231, %v198
  %v233 = vpop.permute.xlu0 %232
  %236 = vset.pattern.permute.xlu0 0
  %237 = vperm.xlu0 %236, %v199
  %v238 = vpop.permute.xlu0 %237
  %241 = vset.pattern.permute.xlu0 0
  %242 = vperm.xlu0 %241, %v200
  %v243 = vpop.permute.xlu0 %242
  %246 = vset.pattern.permute.xlu0 0
  %247 = vperm.xlu0 %246, %v201
  %v248 = vpop.permute.xlu0 %247
  %251 = vset.pattern.permute.xlu0 0
  %252 = vperm.xlu0 %251, %v202
  %v253 = vpop.permute.xlu0 %252
  %256 = vset.pattern.permute.xlu0 0
  %257 = vperm.xlu0 %256, %v203
  %v258 = vpop.permute.xlu0 %257
  %261 = vset.pattern.permute.xlu0 0
  %262 = vperm.xlu0 %261, %v204
  %v263 = vpop.permute.xlu0 %262
  %266 = vset.pattern.permute.xlu0 0
  %267 = vperm.xlu0 %266, %v205
  %v268 = vpop.permute.xlu0 %267
  %271 = vset.pattern.permute.xlu0 0
  %272 = vperm.xlu0 %271, %v206
  %v273 = vpop.permute.xlu0 %272
  %276 = vset.pattern.permute.xlu0 0
  %277 = vperm.xlu0 %276, %v207
  %v278 = vpop.permute.xlu0 %277
  %281 = vset.pattern.permute.xlu0 0
  %282 = vperm.xlu0 %281, %v208
  %v283 = vpop.permute.xlu0 %282
  %286 = vset.pattern.permute.xlu0 0
  %287 = vperm.xlu0 %286, %v209
  %v288 = vpop.permute.xlu0 %287
  %v290 = vmul.f32 %v131, %v213
  %v291 = vmul.f32 %v134, %v218
  %v292 = vmul.f32 %v137, %v223
  %v293 = vmul.f32 %v140, %v228
  %v294 = vmul.f32 %v143, %v233
  %v295 = vmul.f32 %v146, %v238
  %v296 = vmul.f32 %v149, %v243
  %v297 = vmul.f32 %v152, %v248
  %v298 = vmul.f32 %v155, %v253
  %v299 = vmul.f32 %v158, %v258
  %v300 = vmul.f32 %v161, %v263
  %v301 = vmul.f32 %v164, %v268
  %v302 = vmul.f32 %v167, %v273
  %v303 = vmul.f32 %v170, %v278
  %v304 = vmul.f32 %v173, %v283
  %v305 = vmul.f32 %v176, %v288
  %v306 = vld [vmem:[%s3] sm:$0xff]
  %v307 = vld [vmem:[%s3 + $0x8] sm:$0xff]
  %v308 = vld [vmem:[%s3 + $0x10] sm:$0xff]
  %v309 = vld [vmem:[%s3 + $0x18] sm:$0xff]
  %v310 = vld [vmem:[%s3 + $0x20] sm:$0xff]
  %v311 = vld [vmem:[%s3 + $0x28] sm:$0xff]
  %v312 = vld [vmem:[%s3 + $0x30] sm:$0xff]
  %v313 = vld [vmem:[%s3 + $0x38] sm:$0xff]
  %v314 = vld [vmem:[%s3 + $0x40] sm:$0xff]
  %v315 = vld [vmem:[%s3 + $0x48] sm:$0xff]
  %v316 = vld [vmem:[%s3 + $0x50] sm:$0xff]
  %v317 = vld [vmem:[%s3 + $0x58] sm:$0xff]
  %v318 = vld [vmem:[%s3 + $0x60] sm:$0xff]
  %v319 = vld [vmem:[%s3 + $0x68] sm:$0xff]
  %v320 = vld [vmem:[%s3 + $0x70] sm:$0xff]
  %v321 = vld [vmem:[%s3 + $0x78] sm:$0xff]
  %323 = vset.pattern.permute.xlu0 0
  %324 = vperm.xlu0 %323, %v178
  %v325 = vpop.permute.xlu0 %324
  %328 = vset.pattern.permute.xlu0 0
  %329 = vperm.xlu0 %328, %v179
  %v330 = vpop.permute.xlu0 %329
  %333 = vset.pattern.permute.xlu0 0
  %334 = vperm.xlu0 %333, %v180
  %v335 = vpop.permute.xlu0 %334
  %338 = vset.pattern.permute.xlu0 0
  %339 = vperm.xlu0 %338, %v181
  %v340 = vpop.permute.xlu0 %339
  %343 = vset.pattern.permute.xlu0 0
  %344 = vperm.xlu0 %343, %v182
  %v345 = vpop.permute.xlu0 %344
  %348 = vset.pattern.permute.xlu0 0
  %349 = vperm.xlu0 %348, %v183
  %v350 = vpop.permute.xlu0 %349
  %353 = vset.pattern.permute.xlu0 0
  %354 = vperm.xlu0 %353, %v184
  %v355 = vpop.permute.xlu0 %354
  %358 = vset.pattern.permute.xlu0 0
  %359 = vperm.xlu0 %358, %v185
  %v360 = vpop.permute.xlu0 %359
  %363 = vset.pattern.permute.xlu0 0
  %364 = vperm.xlu0 %363, %v186
  %v365 = vpop.permute.xlu0 %364
  %368 = vset.pattern.permute.xlu0 0
  %369 = vperm.xlu0 %368, %v187
  %v370 = vpop.permute.xlu0 %369
  %373 = vset.pattern.permute.xlu0 0
  %374 = vperm.xlu0 %373, %v188
  %v375 = vpop.permute.xlu0 %374
  %378 = vset.pattern.permute.xlu0 0
  %379 = vperm.xlu0 %378, %v189
  %v380 = vpop.permute.xlu0 %379
  %383 = vset.pattern.permute.xlu0 0
  %384 = vperm.xlu0 %383, %v190
  %v385 = vpop.permute.xlu0 %384
  %388 = vset.pattern.permute.xlu0 0
  %389 = vperm.xlu0 %388, %v191
  %v390 = vpop.permute.xlu0 %389
  %393 = vset.pattern.permute.xlu0 0
  %394 = vperm.xlu0 %393, %v192
  %v395 = vpop.permute.xlu0 %394
  %398 = vset.pattern.permute.xlu0 0
  %399 = vperm.xlu0 %398, %v193
  %v400 = vpop.permute.xlu0 %399
  %v402 = vmul.f32 %v306, %v325
  %v403 = vmul.f32 %v307, %v330
  %v404 = vmul.f32 %v308, %v335
  %v405 = vmul.f32 %v309, %v340
  %v406 = vmul.f32 %v310, %v345
  %v407 = vmul.f32 %v311, %v350
  %v408 = vmul.f32 %v312, %v355
  %v409 = vmul.f32 %v313, %v360
  %v410 = vmul.f32 %v314, %v365
  %v411 = vmul.f32 %v315, %v370
  %v412 = vmul.f32 %v316, %v375
  %v413 = vmul.f32 %v317, %v380
  %v414 = vmul.f32 %v318, %v385
  %v415 = vmul.f32 %v319, %v390
  %v416 = vmul.f32 %v320, %v395
  %v417 = vmul.f32 %v321, %v400
  %v418 = vadd.f32 %v290, %v402
  %v419 = vadd.f32 %v291, %v403
  %v420 = vadd.f32 %v292, %v404
  %v421 = vadd.f32 %v293, %v405
  %v422 = vadd.f32 %v294, %v406
  %v423 = vadd.f32 %v295, %v407
  %v424 = vadd.f32 %v296, %v408
  %v425 = vadd.f32 %v297, %v409
  %v426 = vadd.f32 %v298, %v410
  %v427 = vadd.f32 %v299, %v411
  %v428 = vadd.f32 %v300, %v412
  %v429 = vadd.f32 %v301, %v413
  %v430 = vadd.f32 %v302, %v414
  %v431 = vadd.f32 %v303, %v415
  %v432 = vadd.f32 %v304, %v416
  %v433 = vadd.f32 %v305, %v417
  %v434 = vld [vmem:[%s5] sm:$0x1]
  %v435 = vld [vmem:[%s6] sm:$0x1]
  %v436 = vld [vmem:[%s7] sm:$0xff]
  %v437 = vld [vmem:[%s8] sm:$0x1]
  %v438 = vld [vmem:[%s9] sm:$0xff]
  %v439 = vld [vmem:[%s9 + $0x8] sm:$0xff]
  %v440 = vld [vmem:[%s9 + $0x10] sm:$0xff]
  %v441 = vld [vmem:[%s10] sm:$0x1]
  %vm442 = vcmask 64512
  %v443 = vsel %vm442, %v418, 0.0
  %444 = vadd.xlane.f32.xlu0 %v443
  %v445 = vpop.xlane.xlu0 %444
  %v446 = vsel %vm442, %v419, 0.0
  %447 = vadd.xlane.f32.xlu0 %v446
  %v448 = vpop.xlane.xlu0 %447
  %v449 = vsel %vm442, %v420, 0.0
  %450 = vadd.xlane.f32.xlu0 %v449
  %v451 = vpop.xlane.xlu0 %450
  %v452 = vsel %vm442, %v421, 0.0
  %453 = vadd.xlane.f32.xlu0 %v452
  %v454 = vpop.xlane.xlu0 %453
  %v455 = vsel %vm442, %v422, 0.0
  %456 = vadd.xlane.f32.xlu0 %v455
  %v457 = vpop.xlane.xlu0 %456
  %v458 = vsel %vm442, %v423, 0.0
  %459 = vadd.xlane.f32.xlu0 %v458
  %v460 = vpop.xlane.xlu0 %459
  %v461 = vsel %vm442, %v424, 0.0
  %462 = vadd.xlane.f32.xlu0 %v461
  %v463 = vpop.xlane.xlu0 %462
  %v464 = vsel %vm442, %v425, 0.0
  %465 = vadd.xlane.f32.xlu0 %v464
  %v466 = vpop.xlane.xlu0 %465
  %v467 = vsel %vm442, %v426, 0.0
  %468 = vadd.xlane.f32.xlu0 %v467
  %v469 = vpop.xlane.xlu0 %468
  %v470 = vsel %vm442, %v427, 0.0
  %471 = vadd.xlane.f32.xlu0 %v470
  %v472 = vpop.xlane.xlu0 %471
  %v473 = vsel %vm442, %v428, 0.0
  %474 = vadd.xlane.f32.xlu0 %v473
  %v475 = vpop.xlane.xlu0 %474
  %v476 = vsel %vm442, %v429, 0.0
  %477 = vadd.xlane.f32.xlu0 %v476
  %v478 = vpop.xlane.xlu0 %477
  %v479 = vsel %vm442, %v430, 0.0
  %480 = vadd.xlane.f32.xlu0 %v479
  %v481 = vpop.xlane.xlu0 %480
  %v482 = vsel %vm442, %v431, 0.0
  %483 = vadd.xlane.f32.xlu0 %v482
  %v484 = vpop.xlane.xlu0 %483
  %v485 = vsel %vm442, %v432, 0.0
  %486 = vadd.xlane.f32.xlu0 %v485
  %v487 = vpop.xlane.xlu0 %486
  %v488 = vsel %vm442, %v433, 0.0
  %489 = vadd.xlane.f32.xlu0 %v488
  %v490 = vpop.xlane.xlu0 %489
  %v491 = vrcp.pop 8.0
  %v492 = vmul.f32 8.0, %v491
  %v493 = vsub.f32 1.0, %v492
  %v494 = vmul.f32 %v491, %v493
  %v495 = vadd.f32 %v491, %v494
  %vm496 = vweird.f32 %v491
  %v497 = vsel %vm496, %v491, %v495
  %v498 = vmul.f32 %v445, %v497
  %v499 = vmul.f32 %v448, %v497
  %v500 = vmul.f32 %v451, %v497
  %v501 = vmul.f32 %v454, %v497
  %v502 = vmul.f32 %v457, %v497
  %v503 = vmul.f32 %v460, %v497
  %v504 = vmul.f32 %v463, %v497
  %v505 = vmul.f32 %v466, %v497
  %v506 = vmul.f32 %v469, %v497
  %v507 = vmul.f32 %v472, %v497
  %v508 = vmul.f32 %v475, %v497
  %v509 = vmul.f32 %v478, %v497
  %v510 = vmul.f32 %v481, %v497
  %v511 = vmul.f32 %v484, %v497
  %v512 = vmul.f32 %v487, %v497
  %v513 = vmul.f32 %v490, %v497
  %v514 = vsub.f32 %v418, %v498
  %v515 = vsub.f32 %v419, %v499
  %v516 = vsub.f32 %v420, %v500
  %v517 = vsub.f32 %v421, %v501
  %v518 = vsub.f32 %v422, %v502
  %v519 = vsub.f32 %v423, %v503
  %v520 = vsub.f32 %v424, %v504
  %v521 = vsub.f32 %v425, %v505
  %v522 = vsub.f32 %v426, %v506
  %v523 = vsub.f32 %v427, %v507
  %v524 = vsub.f32 %v428, %v508
  %v525 = vsub.f32 %v429, %v509
  %v526 = vsub.f32 %v430, %v510
  %v527 = vsub.f32 %v431, %v511
  %v528 = vsub.f32 %v432, %v512
  %v529 = vsub.f32 %v433, %v513
  %v530 = vmul.f32 %v514, %v514
  %v531 = vmul.f32 %v515, %v515
  %v532 = vmul.f32 %v516, %v516
  %v533 = vmul.f32 %v517, %v517
  %v534 = vmul.f32 %v518, %v518
  %v535 = vmul.f32 %v519, %v519
  %v536 = vmul.f32 %v520, %v520
  %v537 = vmul.f32 %v521, %v521
  %v538 = vmul.f32 %v522, %v522
  %v539 = vmul.f32 %v523, %v523
  %v540 = vmul.f32 %v524, %v524
  %v541 = vmul.f32 %v525, %v525
  %v542 = vmul.f32 %v526, %v526
  %v543 = vmul.f32 %v527, %v527
  %v544 = vmul.f32 %v528, %v528
  %v545 = vmul.f32 %v529, %v529
  %v546 = vsel %vm442, %v530, 0.0
  %547 = vadd.xlane.f32.xlu0 %v546
  %v548 = vpop.xlane.xlu0 %547
  %v549 = vsel %vm442, %v531, 0.0
  %550 = vadd.xlane.f32.xlu0 %v549
  %v551 = vpop.xlane.xlu0 %550
  %v552 = vsel %vm442, %v532, 0.0
  %553 = vadd.xlane.f32.xlu0 %v552
  %v554 = vpop.xlane.xlu0 %553
  %v555 = vsel %vm442, %v533, 0.0
  %556 = vadd.xlane.f32.xlu0 %v555
  %v557 = vpop.xlane.xlu0 %556
  %v558 = vsel %vm442, %v534, 0.0
  %559 = vadd.xlane.f32.xlu0 %v558
  %v560 = vpop.xlane.xlu0 %559
  %v561 = vsel %vm442, %v535, 0.0
  %562 = vadd.xlane.f32.xlu0 %v561
  %v563 = vpop.xlane.xlu0 %562
  %v564 = vsel %vm442, %v536, 0.0
  %565 = vadd.xlane.f32.xlu0 %v564
  %v566 = vpop.xlane.xlu0 %565
  %v567 = vsel %vm442, %v537, 0.0
  %568 = vadd.xlane.f32.xlu0 %v567
  %v569 = vpop.xlane.xlu0 %568
  %v570 = vsel %vm442, %v538, 0.0
  %571 = vadd.xlane.f32.xlu0 %v570
  %v572 = vpop.xlane.xlu0 %571
  %v573 = vsel %vm442, %v539, 0.0
  %574 = vadd.xlane.f32.xlu0 %v573
  %v575 = vpop.xlane.xlu0 %574
  %v576 = vsel %vm442, %v540, 0.0
  %577 = vadd.xlane.f32.xlu0 %v576
  %v578 = vpop.xlane.xlu0 %577
  %v579 = vsel %vm442, %v541, 0.0
  %580 = vadd.xlane.f32.xlu0 %v579
  %v581 = vpop.xlane.xlu0 %580
  %v582 = vsel %vm442, %v542, 0.0
  %583 = vadd.xlane.f32.xlu0 %v582
  %v584 = vpop.xlane.xlu0 %583
  %v585 = vsel %vm442, %v543, 0.0
  %586 = vadd.xlane.f32.xlu0 %v585
  %v587 = vpop.xlane.xlu0 %586
  %v588 = vsel %vm442, %v544, 0.0
  %589 = vadd.xlane.f32.xlu0 %v588
  %v590 = vpop.xlane.xlu0 %589
  %v591 = vsel %vm442, %v545, 0.0
  %592 = vadd.xlane.f32.xlu0 %v591
  %v593 = vpop.xlane.xlu0 %592
  %v594 = vmul.f32 %v548, %v497
  %v595 = vmul.f32 %v551, %v497
  %v596 = vmul.f32 %v554, %v497
  %v597 = vmul.f32 %v557, %v497
  %v598 = vmul.f32 %v560, %v497
  %v599 = vmul.f32 %v563, %v497
  %v600 = vmul.f32 %v566, %v497
  %v601 = vmul.f32 %v569, %v497
  %v602 = vmul.f32 %v572, %v497
  %v603 = vmul.f32 %v575, %v497
  %v604 = vmul.f32 %v578, %v497
  %v605 = vmul.f32 %v581, %v497
  %v606 = vmul.f32 %v584, %v497
  %v607 = vmul.f32 %v587, %v497
  %v608 = vmul.f32 %v590, %v497
  %v609 = vmul.f32 %v593, %v497
  %v610 = vadd.f32 %v594, 1e-05
  %v611 = vadd.f32 %v595, 1e-05
  %v612 = vadd.f32 %v596, 1e-05
  %v613 = vadd.f32 %v597, 1e-05
  %v614 = vadd.f32 %v598, 1e-05
  %v615 = vadd.f32 %v599, 1e-05
  %v616 = vadd.f32 %v600, 1e-05
  %v617 = vadd.f32 %v601, 1e-05
  %v618 = vadd.f32 %v602, 1e-05
  %v619 = vadd.f32 %v603, 1e-05
  %v620 = vadd.f32 %v604, 1e-05
  %v621 = vadd.f32 %v605, 1e-05
  %v622 = vadd.f32 %v606, 1e-05
  %v623 = vadd.f32 %v607, 1e-05
  %v624 = vadd.f32 %v608, 1e-05
  %v625 = vadd.f32 %v609, 1e-05
  %v626 = vrsqrt.pop %v610
  %v627 = vmul.f32 %v626, %v610
  %v628 = vmul.f32 %v627, %v626
  %v629 = vmul.f32 0.5, %v628
  %v630 = vsub.f32 1.5, %v629
  %v631 = vmul.f32 %v626, %v630
  %vm632 = vweird.f32 %v610
  %vm633 = vweird.f32 %v626
  %vm634 = vmor %vm632, %vm633
  %v635 = vsel %vm634, %v626, %v631
  %v636 = vrsqrt.pop %v611
  %v637 = vmul.f32 %v636, %v611
  %v638 = vmul.f32 %v637, %v636
  %v639 = vmul.f32 0.5, %v638
  %v640 = vsub.f32 1.5, %v639
  %v641 = vmul.f32 %v636, %v640
  %vm642 = vweird.f32 %v611
  %vm643 = vweird.f32 %v636
  %vm644 = vmor %vm642, %vm643
  %v645 = vsel %vm644, %v636, %v641
  %v646 = vrsqrt.pop %v612
  %v647 = vmul.f32 %v646, %v612
  %v648 = vmul.f32 %v647, %v646
  %v649 = vmul.f32 0.5, %v648
  %v650 = vsub.f32 1.5, %v649
  %v651 = vmul.f32 %v646, %v650
  %vm652 = vweird.f32 %v612
  %vm653 = vweird.f32 %v646
  %vm654 = vmor %vm652, %vm653
  %v655 = vsel %vm654, %v646, %v651
  %v656 = vrsqrt.pop %v613
  %v657 = vmul.f32 %v656, %v613
  %v658 = vmul.f32 %v657, %v656
  %v659 = vmul.f32 0.5, %v658
  %v660 = vsub.f32 1.5, %v659
  %v661 = vmul.f32 %v656, %v660
  %vm662 = vweird.f32 %v613
  %vm663 = vweird.f32 %v656
  %vm664 = vmor %vm662, %vm663
  %v665 = vsel %vm664, %v656, %v661
  %v666 = vrsqrt.pop %v614
  %v667 = vmul.f32 %v666, %v614
  %v668 = vmul.f32 %v667, %v666
  %v669 = vmul.f32 0.5, %v668
  %v670 = vsub.f32 1.5, %v669
  %v671 = vmul.f32 %v666, %v670
  %vm672 = vweird.f32 %v614
  %vm673 = vweird.f32 %v666
  %vm674 = vmor %vm672, %vm673
  %v675 = vsel %vm674, %v666, %v671
  %v676 = vrsqrt.pop %v615
  %v677 = vmul.f32 %v676, %v615
  %v678 = vmul.f32 %v677, %v676
  %v679 = vmul.f32 0.5, %v678
  %v680 = vsub.f32 1.5, %v679
  %v681 = vmul.f32 %v676, %v680
  %vm682 = vweird.f32 %v615
  %vm683 = vweird.f32 %v676
  %vm684 = vmor %vm682, %vm683
  %v685 = vsel %vm684, %v676, %v681
  %v686 = vrsqrt.pop %v616
  %v687 = vmul.f32 %v686, %v616
  %v688 = vmul.f32 %v687, %v686
  %v689 = vmul.f32 0.5, %v688
  %v690 = vsub.f32 1.5, %v689
  %v691 = vmul.f32 %v686, %v690
  %vm692 = vweird.f32 %v616
  %vm693 = vweird.f32 %v686
  %vm694 = vmor %vm692, %vm693
  %v695 = vsel %vm694, %v686, %v691
  %v696 = vrsqrt.pop %v617
  %v697 = vmul.f32 %v696, %v617
  %v698 = vmul.f32 %v697, %v696
  %v699 = vmul.f32 0.5, %v698
  %v700 = vsub.f32 1.5, %v699
  %v701 = vmul.f32 %v696, %v700
  %vm702 = vweird.f32 %v617
  %vm703 = vweird.f32 %v696
  %vm704 = vmor %vm702, %vm703
  %v705 = vsel %vm704, %v696, %v701
  %v706 = vrsqrt.pop %v618
  %v707 = vmul.f32 %v706, %v618
  %v708 = vmul.f32 %v707, %v706
  %v709 = vmul.f32 0.5, %v708
  %v710 = vsub.f32 1.5, %v709
  %v711 = vmul.f32 %v706, %v710
  %vm712 = vweird.f32 %v618
  %vm713 = vweird.f32 %v706
  %vm714 = vmor %vm712, %vm713
  %v715 = vsel %vm714, %v706, %v711
  %v716 = vrsqrt.pop %v619
  %v717 = vmul.f32 %v716, %v619
  %v718 = vmul.f32 %v717, %v716
  %v719 = vmul.f32 0.5, %v718
  %v720 = vsub.f32 1.5, %v719
  %v721 = vmul.f32 %v716, %v720
  %vm722 = vweird.f32 %v619
  %vm723 = vweird.f32 %v716
  %vm724 = vmor %vm722, %vm723
  %v725 = vsel %vm724, %v716, %v721
  %v726 = vrsqrt.pop %v620
  %v727 = vmul.f32 %v726, %v620
  %v728 = vmul.f32 %v727, %v726
  %v729 = vmul.f32 0.5, %v728
  %v730 = vsub.f32 1.5, %v729
  %v731 = vmul.f32 %v726, %v730
  %vm732 = vweird.f32 %v620
  %vm733 = vweird.f32 %v726
  %vm734 = vmor %vm732, %vm733
  %v735 = vsel %vm734, %v726, %v731
  %v736 = vrsqrt.pop %v621
  %v737 = vmul.f32 %v736, %v621
  %v738 = vmul.f32 %v737, %v736
  %v739 = vmul.f32 0.5, %v738
  %v740 = vsub.f32 1.5, %v739
  %v741 = vmul.f32 %v736, %v740
  %vm742 = vweird.f32 %v621
  %vm743 = vweird.f32 %v736
  %vm744 = vmor %vm742, %vm743
  %v745 = vsel %vm744, %v736, %v741
  %v746 = vrsqrt.pop %v622
  %v747 = vmul.f32 %v746, %v622
  %v748 = vmul.f32 %v747, %v746
  %v749 = vmul.f32 0.5, %v748
  %v750 = vsub.f32 1.5, %v749
  %v751 = vmul.f32 %v746, %v750
  %vm752 = vweird.f32 %v622
  %vm753 = vweird.f32 %v746
  %vm754 = vmor %vm752, %vm753
  %v755 = vsel %vm754, %v746, %v751
  %v756 = vrsqrt.pop %v623
  %v757 = vmul.f32 %v756, %v623
  %v758 = vmul.f32 %v757, %v756
  %v759 = vmul.f32 0.5, %v758
  %v760 = vsub.f32 1.5, %v759
  %v761 = vmul.f32 %v756, %v760
  %vm762 = vweird.f32 %v623
  %vm763 = vweird.f32 %v756
  %vm764 = vmor %vm762, %vm763
  %v765 = vsel %vm764, %v756, %v761
  %v766 = vrsqrt.pop %v624
  %v767 = vmul.f32 %v766, %v624
  %v768 = vmul.f32 %v767, %v766
  %v769 = vmul.f32 0.5, %v768
  %v770 = vsub.f32 1.5, %v769
  %v771 = vmul.f32 %v766, %v770
  %vm772 = vweird.f32 %v624
  %vm773 = vweird.f32 %v766
  %vm774 = vmor %vm772, %vm773
  %v775 = vsel %vm774, %v766, %v771
  %v776 = vrsqrt.pop %v625
  %v777 = vmul.f32 %v776, %v625
  %v778 = vmul.f32 %v777, %v776
  %v779 = vmul.f32 0.5, %v778
  %v780 = vsub.f32 1.5, %v779
  %v781 = vmul.f32 %v776, %v780
  %vm782 = vweird.f32 %v625
  %vm783 = vweird.f32 %v776
  %vm784 = vmor %vm782, %vm783
  %v785 = vsel %vm784, %v776, %v781
  %v786 = vmul.f32 %v514, %v635
  %v787 = vmul.f32 %v515, %v645
  %v788 = vmul.f32 %v516, %v655
  %v789 = vmul.f32 %v517, %v665
  %v790 = vmul.f32 %v518, %v675
  %v791 = vmul.f32 %v519, %v685
  %v792 = vmul.f32 %v520, %v695
  %v793 = vmul.f32 %v521, %v705
  %v794 = vmul.f32 %v522, %v715
  %v795 = vmul.f32 %v523, %v725
  %v796 = vmul.f32 %v524, %v735
  %v797 = vmul.f32 %v525, %v745
  %v798 = vmul.f32 %v526, %v755
  %v799 = vmul.f32 %v527, %v765
  %v800 = vmul.f32 %v528, %v775
  %v801 = vmul.f32 %v529, %v785
  %v803 = vperm.slane %v434, 0
  %v805 = vmul.f32 %v786, %v803
  %v806 = vmul.f32 %v787, %v803
  %v807 = vmul.f32 %v788, %v803
  %v808 = vmul.f32 %v789, %v803
  %v809 = vmul.f32 %v790, %v803
  %v810 = vmul.f32 %v791, %v803
  %v811 = vmul.f32 %v792, %v803
  %v812 = vmul.f32 %v793, %v803
  %v813 = vmul.f32 %v794, %v803
  %v814 = vmul.f32 %v795, %v803
  %v815 = vmul.f32 %v796, %v803
  %v816 = vmul.f32 %v797, %v803
  %v817 = vmul.f32 %v798, %v803
  %v818 = vmul.f32 %v799, %v803
  %v819 = vmul.f32 %v800, %v803
  %v820 = vmul.f32 %v801, %v803
  %v822 = vperm.slane %v435, 0
  %v824 = vadd.f32 %v805, %v822
  %v825 = vadd.f32 %v806, %v822
  %v826 = vadd.f32 %v807, %v822
  %v827 = vadd.f32 %v808, %v822
  %v828 = vadd.f32 %v809, %v822
  %v829 = vadd.f32 %v810, %v822
  %v830 = vadd.f32 %v811, %v822
  %v831 = vadd.f32 %v812, %v822
  %v832 = vadd.f32 %v813, %v822
  %v833 = vadd.f32 %v814, %v822
  %v834 = vadd.f32 %v815, %v822
  %v835 = vadd.f32 %v816, %v822
  %v836 = vadd.f32 %v817, %v822
  %v837 = vadd.f32 %v818, %v822
  %v838 = vadd.f32 %v819, %v822
  %v839 = vadd.f32 %v820, %v822
  %v841 = vperm.slane %v437, 0
  %v844 = vsel %vm442, %v824, 0
  %v847 = vsel %vm442, %v825, 0
  %v850 = vsel %vm442, %v826, 0
  %v853 = vsel %vm442, %v827, 0
  %v856 = vsel %vm442, %v828, 0
  %v859 = vsel %vm442, %v829, 0
  %v862 = vsel %vm442, %v830, 0
  %v865 = vsel %vm442, %v831, 0
  %v868 = vsel %vm442, %v832, 0
  %v871 = vsel %vm442, %v833, 0
  %v874 = vsel %vm442, %v834, 0
  %v877 = vsel %vm442, %v835, 0
  %v880 = vsel %vm442, %v836, 0
  %v883 = vsel %vm442, %v837, 0
  %v886 = vsel %vm442, %v838, 0
  %v889 = vsel %vm442, %v839, 0
  %891 = vmatpush.msra.mxu0 0.0
  %892 = vmatpush.msra.mxu0 0.0
  %893 = vmatpush.msra.mxu0 0.0
  %894 = vmatpush.msra.mxu0 0.0
  %895 = vmatpush.msra.mxu0 0.0
  %896 = vmatpush.msra.mxu0 0.0
  %897 = vmatpush.msra.mxu0 0.0
  %898 = vmatpush.msra.mxu0 0.0
  %899 = vmatpush.msra.mxu0 0.0
  %900 = vmatpush.msra.mxu0 0.0
  %901 = vmatpush.msra.mxu0 0.0
  %902 = vmatpush.msra.mxu0 0.0
  %903 = vmatpush.msra.mxu0 0.0
  %904 = vmatpush.msra.mxu0 0.0
  %905 = vmatpush.msra.mxu0 0.0
  %906 = vmatpush.msra.mxu0 %v436
  %907 = vmatmul.f32.gmra.mxu0 %v844
  %v908 = vpop.f32.mrf.mxu0
  %v909 = vadd.f32 %v841, %v908
  %910 = vmatmul.f32.gmra.mxu0 %v847
  %v911 = vpop.f32.mrf.mxu0
  %v912 = vadd.f32 %v841, %v911
  %913 = vmatmul.f32.gmra.mxu0 %v850
  %v914 = vpop.f32.mrf.mxu0
  %v915 = vadd.f32 %v841, %v914
  %916 = vmatmul.f32.gmra.mxu0 %v853
  %v917 = vpop.f32.mrf.mxu0
  %v918 = vadd.f32 %v841, %v917
  %919 = vmatmul.f32.gmra.mxu0 %v856
  %v920 = vpop.f32.mrf.mxu0
  %v921 = vadd.f32 %v841, %v920
  %922 = vmatmul.f32.gmra.mxu0 %v859
  %v923 = vpop.f32.mrf.mxu0
  %v924 = vadd.f32 %v841, %v923
  %925 = vmatmul.f32.gmra.mxu0 %v862
  %v926 = vpop.f32.mrf.mxu0
  %v927 = vadd.f32 %v841, %v926
  %928 = vmatmul.f32.gmra.mxu0 %v865
  %v929 = vpop.f32.mrf.mxu0
  %v930 = vadd.f32 %v841, %v929
  %931 = vmatmul.f32.gmra.mxu0 %v868
  %v932 = vpop.f32.mrf.mxu0
  %v933 = vadd.f32 %v841, %v932
  %934 = vmatmul.f32.gmra.mxu0 %v871
  %v935 = vpop.f32.mrf.mxu0
  %v936 = vadd.f32 %v841, %v935
  %937 = vmatmul.f32.gmra.mxu0 %v874
  %v938 = vpop.f32.mrf.mxu0
  %v939 = vadd.f32 %v841, %v938
  %940 = vmatmul.f32.gmra.mxu0 %v877
  %v941 = vpop.f32.mrf.mxu0
  %v942 = vadd.f32 %v841, %v941
  %943 = vmatmul.f32.gmra.mxu0 %v880
  %v944 = vpop.f32.mrf.mxu0
  %v945 = vadd.f32 %v841, %v944
  %946 = vmatmul.f32.gmra.mxu0 %v883
  %v947 = vpop.f32.mrf.mxu0
  %v948 = vadd.f32 %v841, %v947
  %949 = vmatmul.f32.gmra.mxu0 %v886
  %v950 = vpop.f32.mrf.mxu0
  %v951 = vadd.f32 %v841, %v950
  %952 = vmatmul.f32.gmra.mxu0 %v889
  %v953 = vpop.f32.mrf.mxu0
  %v954 = vadd.f32 %v841, %v953
  %955 = vdwg.mxu0
  %v956 = vmul.f32 %v909, 0.5
  %v957 = vmul.f32 %v912, 0.5
  %v958 = vmul.f32 %v915, 0.5
  %v959 = vmul.f32 %v918, 0.5
  %v960 = vmul.f32 %v921, 0.5
  %v961 = vmul.f32 %v924, 0.5
  %v962 = vmul.f32 %v927, 0.5
  %v963 = vmul.f32 %v930, 0.5
  %v964 = vmul.f32 %v933, 0.5
  %v965 = vmul.f32 %v936, 0.5
  %v966 = vmul.f32 %v939, 0.5
  %v967 = vmul.f32 %v942, 0.5
  %v968 = vmul.f32 %v945, 0.5
  %v969 = vmul.f32 %v948, 0.5
  %v970 = vmul.f32 %v951, 0.5
  %v971 = vmul.f32 %v954, 0.5
  %v972 = vmul.f32 %v909, 0.70710677
  %v973 = vmul.f32 %v912, 0.70710677
  %v974 = vmul.f32 %v915, 0.70710677
  %v975 = vmul.f32 %v918, 0.70710677
  %v976 = vmul.f32 %v921, 0.70710677
  %v977 = vmul.f32 %v924, 0.70710677
  %v978 = vmul.f32 %v927, 0.70710677
  %v979 = vmul.f32 %v930, 0.70710677
  %v980 = vmul.f32 %v933, 0.70710677
  %v981 = vmul.f32 %v936, 0.70710677
  %v982 = vmul.f32 %v939, 0.70710677
  %v983 = vmul.f32 %v942, 0.70710677
  %v984 = vmul.f32 %v945, 0.70710677
  %v985 = vmul.f32 %v948, 0.70710677
  %v986 = vmul.f32 %v951, 0.70710677
  %v987 = vmul.f32 %v954, 0.70710677
  %v988 = vmul.f32 %v972, %v972
  %v989 = vmin.f32 16.0, %v988
  %v990 = vmul.f32 %v989, 2.1237322e-06
  %v991 = vadd.f32 %v990, 0.00028619796
  %v992 = vmul.f32 %v989, %v991
  %v993 = vadd.f32 %v992, 0.0036580483
  %v994 = vmul.f32 %v989, %v993
  %v995 = vadd.f32 %v994, 0.05243302
  %v996 = vmul.f32 %v989, %v995
  %v997 = vadd.f32 %v996, 0.18741608
  %v998 = vmul.f32 %v989, %v997
  %v999 = vadd.f32 %v998, 1.1283791
  %v1000 = vmul.f32 %v972, %v999
  %v1001 = vmul.f32 %v989, 3.8918573e-05
  %v1002 = vadd.f32 %v1001, 0.001143296
  %v1003 = vmul.f32 %v989, %v1002
  %v1004 = vadd.f32 %v1003, 0.014752088
  %v1005 = vmul.f32 %v989, %v1004
  %v1006 = vadd.f32 %v1005, 0.112945676
  %v1007 = vmul.f32 %v989, %v1006
  %v1008 = vadd.f32 %v1007, 0.4994258
  %v1009 = vmul.f32 %v989, %v1008
  %v1010 = vadd.f32 %v1009, 1.0
  %v1011 = vrcp.pop %v1010
  %v1012 = vmul.f32 %v1010, %v1011
  %v1013 = vsub.f32 1.0, %v1012
  %v1014 = vmul.f32 %v1011, %v1013
  %v1015 = vadd.f32 %v1011, %v1014
  %vm1016 = vweird.f32 %v1010
  %vm1017 = vweird.f32 %v1011
  %vm1018 = vmor %vm1016, %vm1017
  %v1019 = vsel %vm1018, %v1011, %v1015
  %v1020 = vand.u32 2147483647, %v1010
  %vm1021 = vcmp.eq.f32.partialorder %v1020, 8.507059e+37
  %v1022 = vand.u32 %v1010, 2147483648
  %v1023 = vor.u32 1.1754944e-38, %v1022
  %v1024 = vsel %vm1021, %v1023, %v1019
  %v1025 = vmul.f32 %v1000, %v1024
  %v1026 = vmin.f32 %v1025, 1.0
  %v1027 = vmax.f32 %v1026, -1.0
  %v1028 = vmul.f32 %v973, %v973
  %v1029 = vmin.f32 16.0, %v1028
  %v1030 = vmul.f32 %v1029, 2.1237322e-06
  %v1031 = vadd.f32 %v1030, 0.00028619796
  %v1032 = vmul.f32 %v1029, %v1031
  %v1033 = vadd.f32 %v1032, 0.0036580483
  %v1034 = vmul.f32 %v1029, %v1033
  %v1035 = vadd.f32 %v1034, 0.05243302
  %v1036 = vmul.f32 %v1029, %v1035
  %v1037 = vadd.f32 %v1036, 0.18741608
  %v1038 = vmul.f32 %v1029, %v1037
  %v1039 = vadd.f32 %v1038, 1.1283791
  %v1040 = vmul.f32 %v973, %v1039
  %v1041 = vmul.f32 %v1029, 3.8918573e-05
  %v1042 = vadd.f32 %v1041, 0.001143296
  %v1043 = vmul.f32 %v1029, %v1042
  %v1044 = vadd.f32 %v1043, 0.014752088
  %v1045 = vmul.f32 %v1029, %v1044
  %v1046 = vadd.f32 %v1045, 0.112945676
  %v1047 = vmul.f32 %v1029, %v1046
  %v1048 = vadd.f32 %v1047, 0.4994258
  %v1049 = vmul.f32 %v1029, %v1048
  %v1050 = vadd.f32 %v1049, 1.0
  %v1051 = vrcp.pop %v1050
  %v1052 = vmul.f32 %v1050, %v1051
  %v1053 = vsub.f32 1.0, %v1052
  %v1054 = vmul.f32 %v1051, %v1053
  %v1055 = vadd.f32 %v1051, %v1054
  %vm1056 = vweird.f32 %v1050
  %vm1057 = vweird.f32 %v1051
  %vm1058 = vmor %vm1056, %vm1057
  %v1059 = vsel %vm1058, %v1051, %v1055
  %v1060 = vand.u32 2147483647, %v1050
  %vm1061 = vcmp.eq.f32.partialorder %v1060, 8.507059e+37
  %v1062 = vand.u32 %v1050, 2147483648
  %v1063 = vor.u32 1.1754944e-38, %v1062
  %v1064 = vsel %vm1061, %v1063, %v1059
  %v1065 = vmul.f32 %v1040, %v1064
  %v1066 = vmin.f32 %v1065, 1.0
  %v1067 = vmax.f32 %v1066, -1.0
  %v1068 = vmul.f32 %v974, %v974
  %v1069 = vmin.f32 16.0, %v1068
  %v1070 = vmul.f32 %v1069, 2.1237322e-06
  %v1071 = vadd.f32 %v1070, 0.00028619796
  %v1072 = vmul.f32 %v1069, %v1071
  %v1073 = vadd.f32 %v1072, 0.0036580483
  %v1074 = vmul.f32 %v1069, %v1073
  %v1075 = vadd.f32 %v1074, 0.05243302
  %v1076 = vmul.f32 %v1069, %v1075
  %v1077 = vadd.f32 %v1076, 0.18741608
  %v1078 = vmul.f32 %v1069, %v1077
  %v1079 = vadd.f32 %v1078, 1.1283791
  %v1080 = vmul.f32 %v974, %v1079
  %v1081 = vmul.f32 %v1069, 3.8918573e-05
  %v1082 = vadd.f32 %v1081, 0.001143296
  %v1083 = vmul.f32 %v1069, %v1082
  %v1084 = vadd.f32 %v1083, 0.014752088
  %v1085 = vmul.f32 %v1069, %v1084
  %v1086 = vadd.f32 %v1085, 0.112945676
  %v1087 = vmul.f32 %v1069, %v1086
  %v1088 = vadd.f32 %v1087, 0.4994258
  %v1089 = vmul.f32 %v1069, %v1088
  %v1090 = vadd.f32 %v1089, 1.0
  %v1091 = vrcp.pop %v1090
  %v1092 = vmul.f32 %v1090, %v1091
  %v1093 = vsub.f32 1.0, %v1092
  %v1094 = vmul.f32 %v1091, %v1093
  %v1095 = vadd.f32 %v1091, %v1094
  %vm1096 = vweird.f32 %v1090
  %vm1097 = vweird.f32 %v1091
  %vm1098 = vmor %vm1096, %vm1097
  %v1099 = vsel %vm1098, %v1091, %v1095
  %v1100 = vand.u32 2147483647, %v1090
  %vm1101 = vcmp.eq.f32.partialorder %v1100, 8.507059e+37
  %v1102 = vand.u32 %v1090, 2147483648
  %v1103 = vor.u32 1.1754944e-38, %v1102
  %v1104 = vsel %vm1101, %v1103, %v1099
  %v1105 = vmul.f32 %v1080, %v1104
  %v1106 = vmin.f32 %v1105, 1.0
  %v1107 = vmax.f32 %v1106, -1.0
  %v1108 = vmul.f32 %v975, %v975
  %v1109 = vmin.f32 16.0, %v1108
  %v1110 = vmul.f32 %v1109, 2.1237322e-06
  %v1111 = vadd.f32 %v1110, 0.00028619796
  %v1112 = vmul.f32 %v1109, %v1111
  %v1113 = vadd.f32 %v1112, 0.0036580483
  %v1114 = vmul.f32 %v1109, %v1113
  %v1115 = vadd.f32 %v1114, 0.05243302
  %v1116 = vmul.f32 %v1109, %v1115
  %v1117 = vadd.f32 %v1116, 0.18741608
  %v1118 = vmul.f32 %v1109, %v1117
  %v1119 = vadd.f32 %v1118, 1.1283791
  %v1120 = vmul.f32 %v975, %v1119
  %v1121 = vmul.f32 %v1109, 3.8918573e-05
  %v1122 = vadd.f32 %v1121, 0.001143296
  %v1123 = vmul.f32 %v1109, %v1122
  %v1124 = vadd.f32 %v1123, 0.014752088
  %v1125 = vmul.f32 %v1109, %v1124
  %v1126 = vadd.f32 %v1125, 0.112945676
  %v1127 = vmul.f32 %v1109, %v1126
  %v1128 = vadd.f32 %v1127, 0.4994258
  %v1129 = vmul.f32 %v1109, %v1128
  %v1130 = vadd.f32 %v1129, 1.0
  %v1131 = vrcp.pop %v1130
  %v1132 = vmul.f32 %v1130, %v1131
  %v1133 = vsub.f32 1.0, %v1132
  %v1134 = vmul.f32 %v1131, %v1133
  %v1135 = vadd.f32 %v1131, %v1134
  %vm1136 = vweird.f32 %v1130
  %vm1137 = vweird.f32 %v1131
  %vm1138 = vmor %vm1136, %vm1137
  %v1139 = vsel %vm1138, %v1131, %v1135
  %v1140 = vand.u32 2147483647, %v1130
  %vm1141 = vcmp.eq.f32.partialorder %v1140, 8.507059e+37
  %v1142 = vand.u32 %v1130, 2147483648
  %v1143 = vor.u32 1.1754944e-38, %v1142
  %v1144 = vsel %vm1141, %v1143, %v1139
  %v1145 = vmul.f32 %v1120, %v1144
  %v1146 = vmin.f32 %v1145, 1.0
  %v1147 = vmax.f32 %v1146, -1.0
  %v1148 = vmul.f32 %v976, %v976
  %v1149 = vmin.f32 16.0, %v1148
  %v1150 = vmul.f32 %v1149, 2.1237322e-06
  %v1151 = vadd.f32 %v1150, 0.00028619796
  %v1152 = vmul.f32 %v1149, %v1151
  %v1153 = vadd.f32 %v1152, 0.0036580483
  %v1154 = vmul.f32 %v1149, %v1153
  %v1155 = vadd.f32 %v1154, 0.05243302
  %v1156 = vmul.f32 %v1149, %v1155
  %v1157 = vadd.f32 %v1156, 0.18741608
  %v1158 = vmul.f32 %v1149, %v1157
  %v1159 = vadd.f32 %v1158, 1.1283791
  %v1160 = vmul.f32 %v976, %v1159
  %v1161 = vmul.f32 %v1149, 3.8918573e-05
  %v1162 = vadd.f32 %v1161, 0.001143296
  %v1163 = vmul.f32 %v1149, %v1162
  %v1164 = vadd.f32 %v1163, 0.014752088
  %v1165 = vmul.f32 %v1149, %v1164
  %v1166 = vadd.f32 %v1165, 0.112945676
  %v1167 = vmul.f32 %v1149, %v1166
  %v1168 = vadd.f32 %v1167, 0.4994258
  %v1169 = vmul.f32 %v1149, %v1168
  %v1170 = vadd.f32 %v1169, 1.0
  %v1171 = vrcp.pop %v1170
  %v1172 = vmul.f32 %v1170, %v1171
  %v1173 = vsub.f32 1.0, %v1172
  %v1174 = vmul.f32 %v1171, %v1173
  %v1175 = vadd.f32 %v1171, %v1174
  %vm1176 = vweird.f32 %v1170
  %vm1177 = vweird.f32 %v1171
  %vm1178 = vmor %vm1176, %vm1177
  %v1179 = vsel %vm1178, %v1171, %v1175
  %v1180 = vand.u32 2147483647, %v1170
  %vm1181 = vcmp.eq.f32.partialorder %v1180, 8.507059e+37
  %v1182 = vand.u32 %v1170, 2147483648
  %v1183 = vor.u32 1.1754944e-38, %v1182
  %v1184 = vsel %vm1181, %v1183, %v1179
  %v1185 = vmul.f32 %v1160, %v1184
  %v1186 = vmin.f32 %v1185, 1.0
  %v1187 = vmax.f32 %v1186, -1.0
  %v1188 = vmul.f32 %v977, %v977
  %v1189 = vmin.f32 16.0, %v1188
  %v1190 = vmul.f32 %v1189, 2.1237322e-06
  %v1191 = vadd.f32 %v1190, 0.00028619796
  %v1192 = vmul.f32 %v1189, %v1191
  %v1193 = vadd.f32 %v1192, 0.0036580483
  %v1194 = vmul.f32 %v1189, %v1193
  %v1195 = vadd.f32 %v1194, 0.05243302
  %v1196 = vmul.f32 %v1189, %v1195
  %v1197 = vadd.f32 %v1196, 0.18741608
  %v1198 = vmul.f32 %v1189, %v1197
  %v1199 = vadd.f32 %v1198, 1.1283791
  %v1200 = vmul.f32 %v977, %v1199
  %v1201 = vmul.f32 %v1189, 3.8918573e-05
  %v1202 = vadd.f32 %v1201, 0.001143296
  %v1203 = vmul.f32 %v1189, %v1202
  %v1204 = vadd.f32 %v1203, 0.014752088
  %v1205 = vmul.f32 %v1189, %v1204
  %v1206 = vadd.f32 %v1205, 0.112945676
  %v1207 = vmul.f32 %v1189, %v1206
  %v1208 = vadd.f32 %v1207, 0.4994258
  %v1209 = vmul.f32 %v1189, %v1208
  %v1210 = vadd.f32 %v1209, 1.0
  %v1211 = vrcp.pop %v1210
  %v1212 = vmul.f32 %v1210, %v1211
  %v1213 = vsub.f32 1.0, %v1212
  %v1214 = vmul.f32 %v1211, %v1213
  %v1215 = vadd.f32 %v1211, %v1214
  %vm1216 = vweird.f32 %v1210
  %vm1217 = vweird.f32 %v1211
  %vm1218 = vmor %vm1216, %vm1217
  %v1219 = vsel %vm1218, %v1211, %v1215
  %v1220 = vand.u32 2147483647, %v1210
  %vm1221 = vcmp.eq.f32.partialorder %v1220, 8.507059e+37
  %v1222 = vand.u32 %v1210, 2147483648
  %v1223 = vor.u32 1.1754944e-38, %v1222
  %v1224 = vsel %vm1221, %v1223, %v1219
  %v1225 = vmul.f32 %v1200, %v1224
  %v1226 = vmin.f32 %v1225, 1.0
  %v1227 = vmax.f32 %v1226, -1.0
  %v1228 = vmul.f32 %v978, %v978
  %v1229 = vmin.f32 16.0, %v1228
  %v1230 = vmul.f32 %v1229, 2.1237322e-06
  %v1231 = vadd.f32 %v1230, 0.00028619796
  %v1232 = vmul.f32 %v1229, %v1231
  %v1233 = vadd.f32 %v1232, 0.0036580483
  %v1234 = vmul.f32 %v1229, %v1233
  %v1235 = vadd.f32 %v1234, 0.05243302
  %v1236 = vmul.f32 %v1229, %v1235
  %v1237 = vadd.f32 %v1236, 0.18741608
  %v1238 = vmul.f32 %v1229, %v1237
  %v1239 = vadd.f32 %v1238, 1.1283791
  %v1240 = vmul.f32 %v978, %v1239
  %v1241 = vmul.f32 %v1229, 3.8918573e-05
  %v1242 = vadd.f32 %v1241, 0.001143296
  %v1243 = vmul.f32 %v1229, %v1242
  %v1244 = vadd.f32 %v1243, 0.014752088
  %v1245 = vmul.f32 %v1229, %v1244
  %v1246 = vadd.f32 %v1245, 0.112945676
  %v1247 = vmul.f32 %v1229, %v1246
  %v1248 = vadd.f32 %v1247, 0.4994258
  %v1249 = vmul.f32 %v1229, %v1248
  %v1250 = vadd.f32 %v1249, 1.0
  %v1251 = vrcp.pop %v1250
  %v1252 = vmul.f32 %v1250, %v1251
  %v1253 = vsub.f32 1.0, %v1252
  %v1254 = vmul.f32 %v1251, %v1253
  %v1255 = vadd.f32 %v1251, %v1254
  %vm1256 = vweird.f32 %v1250
  %vm1257 = vweird.f32 %v1251
  %vm1258 = vmor %vm1256, %vm1257
  %v1259 = vsel %vm1258, %v1251, %v1255
  %v1260 = vand.u32 2147483647, %v1250
  %vm1261 = vcmp.eq.f32.partialorder %v1260, 8.507059e+37
  %v1262 = vand.u32 %v1250, 2147483648
  %v1263 = vor.u32 1.1754944e-38, %v1262
  %v1264 = vsel %vm1261, %v1263, %v1259
  %v1265 = vmul.f32 %v1240, %v1264
  %v1266 = vmin.f32 %v1265, 1.0
  %v1267 = vmax.f32 %v1266, -1.0
  %v1268 = vmul.f32 %v979, %v979
  %v1269 = vmin.f32 16.0, %v1268
  %v1270 = vmul.f32 %v1269, 2.1237322e-06
  %v1271 = vadd.f32 %v1270, 0.00028619796
  %v1272 = vmul.f32 %v1269, %v1271
  %v1273 = vadd.f32 %v1272, 0.0036580483
  %v1274 = vmul.f32 %v1269, %v1273
  %v1275 = vadd.f32 %v1274, 0.05243302
  %v1276 = vmul.f32 %v1269, %v1275
  %v1277 = vadd.f32 %v1276, 0.18741608
  %v1278 = vmul.f32 %v1269, %v1277
  %v1279 = vadd.f32 %v1278, 1.1283791
  %v1280 = vmul.f32 %v979, %v1279
  %v1281 = vmul.f32 %v1269, 3.8918573e-05
  %v1282 = vadd.f32 %v1281, 0.001143296
  %v1283 = vmul.f32 %v1269, %v1282
  %v1284 = vadd.f32 %v1283, 0.014752088
  %v1285 = vmul.f32 %v1269, %v1284
  %v1286 = vadd.f32 %v1285, 0.112945676
  %v1287 = vmul.f32 %v1269, %v1286
  %v1288 = vadd.f32 %v1287, 0.4994258
  %v1289 = vmul.f32 %v1269, %v1288
  %v1290 = vadd.f32 %v1289, 1.0
  %v1291 = vrcp.pop %v1290
  %v1292 = vmul.f32 %v1290, %v1291
  %v1293 = vsub.f32 1.0, %v1292
  %v1294 = vmul.f32 %v1291, %v1293
  %v1295 = vadd.f32 %v1291, %v1294
  %vm1296 = vweird.f32 %v1290
  %vm1297 = vweird.f32 %v1291
  %vm1298 = vmor %vm1296, %vm1297
  %v1299 = vsel %vm1298, %v1291, %v1295
  %v1300 = vand.u32 2147483647, %v1290
  %vm1301 = vcmp.eq.f32.partialorder %v1300, 8.507059e+37
  %v1302 = vand.u32 %v1290, 2147483648
  %v1303 = vor.u32 1.1754944e-38, %v1302
  %v1304 = vsel %vm1301, %v1303, %v1299
  %v1305 = vmul.f32 %v1280, %v1304
  %v1306 = vmin.f32 %v1305, 1.0
  %v1307 = vmax.f32 %v1306, -1.0
  %v1308 = vmul.f32 %v980, %v980
  %v1309 = vmin.f32 16.0, %v1308
  %v1310 = vmul.f32 %v1309, 2.1237322e-06
  %v1311 = vadd.f32 %v1310, 0.00028619796
  %v1312 = vmul.f32 %v1309, %v1311
  %v1313 = vadd.f32 %v1312, 0.0036580483
  %v1314 = vmul.f32 %v1309, %v1313
  %v1315 = vadd.f32 %v1314, 0.05243302
  %v1316 = vmul.f32 %v1309, %v1315
  %v1317 = vadd.f32 %v1316, 0.18741608
  %v1318 = vmul.f32 %v1309, %v1317
  %v1319 = vadd.f32 %v1318, 1.1283791
  %v1320 = vmul.f32 %v980, %v1319
  %v1321 = vmul.f32 %v1309, 3.8918573e-05
  %v1322 = vadd.f32 %v1321, 0.001143296
  %v1323 = vmul.f32 %v1309, %v1322
  %v1324 = vadd.f32 %v1323, 0.014752088
  %v1325 = vmul.f32 %v1309, %v1324
  %v1326 = vadd.f32 %v1325, 0.112945676
  %v1327 = vmul.f32 %v1309, %v1326
  %v1328 = vadd.f32 %v1327, 0.4994258
  %v1329 = vmul.f32 %v1309, %v1328
  %v1330 = vadd.f32 %v1329, 1.0
  %v1331 = vrcp.pop %v1330
  %v1332 = vmul.f32 %v1330, %v1331
  %v1333 = vsub.f32 1.0, %v1332
  %v1334 = vmul.f32 %v1331, %v1333
  %v1335 = vadd.f32 %v1331, %v1334
  %vm1336 = vweird.f32 %v1330
  %vm1337 = vweird.f32 %v1331
  %vm1338 = vmor %vm1336, %vm1337
  %v1339 = vsel %vm1338, %v1331, %v1335
  %v1340 = vand.u32 2147483647, %v1330
  %vm1341 = vcmp.eq.f32.partialorder %v1340, 8.507059e+37
  %v1342 = vand.u32 %v1330, 2147483648
  %v1343 = vor.u32 1.1754944e-38, %v1342
  %v1344 = vsel %vm1341, %v1343, %v1339
  %v1345 = vmul.f32 %v1320, %v1344
  %v1346 = vmin.f32 %v1345, 1.0
  %v1347 = vmax.f32 %v1346, -1.0
  %v1348 = vmul.f32 %v981, %v981
  %v1349 = vmin.f32 16.0, %v1348
  %v1350 = vmul.f32 %v1349, 2.1237322e-06
  %v1351 = vadd.f32 %v1350, 0.00028619796
  %v1352 = vmul.f32 %v1349, %v1351
  %v1353 = vadd.f32 %v1352, 0.0036580483
  %v1354 = vmul.f32 %v1349, %v1353
  %v1355 = vadd.f32 %v1354, 0.05243302
  %v1356 = vmul.f32 %v1349, %v1355
  %v1357 = vadd.f32 %v1356, 0.18741608
  %v1358 = vmul.f32 %v1349, %v1357
  %v1359 = vadd.f32 %v1358, 1.1283791
  %v1360 = vmul.f32 %v981, %v1359
  %v1361 = vmul.f32 %v1349, 3.8918573e-05
  %v1362 = vadd.f32 %v1361, 0.001143296
  %v1363 = vmul.f32 %v1349, %v1362
  %v1364 = vadd.f32 %v1363, 0.014752088
  %v1365 = vmul.f32 %v1349, %v1364
  %v1366 = vadd.f32 %v1365, 0.112945676
  %v1367 = vmul.f32 %v1349, %v1366
  %v1368 = vadd.f32 %v1367, 0.4994258
  %v1369 = vmul.f32 %v1349, %v1368
  %v1370 = vadd.f32 %v1369, 1.0
  %v1371 = vrcp.pop %v1370
  %v1372 = vmul.f32 %v1370, %v1371
  %v1373 = vsub.f32 1.0, %v1372
  %v1374 = vmul.f32 %v1371, %v1373
  %v1375 = vadd.f32 %v1371, %v1374
  %vm1376 = vweird.f32 %v1370
  %vm1377 = vweird.f32 %v1371
  %vm1378 = vmor %vm1376, %vm1377
  %v1379 = vsel %vm1378, %v1371, %v1375
  %v1380 = vand.u32 2147483647, %v1370
  %vm1381 = vcmp.eq.f32.partialorder %v1380, 8.507059e+37
  %v1382 = vand.u32 %v1370, 2147483648
  %v1383 = vor.u32 1.1754944e-38, %v1382
  %v1384 = vsel %vm1381, %v1383, %v1379
  %v1385 = vmul.f32 %v1360, %v1384
  %v1386 = vmin.f32 %v1385, 1.0
  %v1387 = vmax.f32 %v1386, -1.0
  %v1388 = vmul.f32 %v982, %v982
  %v1389 = vmin.f32 16.0, %v1388
  %v1390 = vmul.f32 %v1389, 2.1237322e-06
  %v1391 = vadd.f32 %v1390, 0.00028619796
  %v1392 = vmul.f32 %v1389, %v1391
  %v1393 = vadd.f32 %v1392, 0.0036580483
  %v1394 = vmul.f32 %v1389, %v1393
  %v1395 = vadd.f32 %v1394, 0.05243302
  %v1396 = vmul.f32 %v1389, %v1395
  %v1397 = vadd.f32 %v1396, 0.18741608
  %v1398 = vmul.f32 %v1389, %v1397
  %v1399 = vadd.f32 %v1398, 1.1283791
  %v1400 = vmul.f32 %v982, %v1399
  %v1401 = vmul.f32 %v1389, 3.8918573e-05
  %v1402 = vadd.f32 %v1401, 0.001143296
  %v1403 = vmul.f32 %v1389, %v1402
  %v1404 = vadd.f32 %v1403, 0.014752088
  %v1405 = vmul.f32 %v1389, %v1404
  %v1406 = vadd.f32 %v1405, 0.112945676
  %v1407 = vmul.f32 %v1389, %v1406
  %v1408 = vadd.f32 %v1407, 0.4994258
  %v1409 = vmul.f32 %v1389, %v1408
  %v1410 = vadd.f32 %v1409, 1.0
  %v1411 = vrcp.pop %v1410
  %v1412 = vmul.f32 %v1410, %v1411
  %v1413 = vsub.f32 1.0, %v1412
  %v1414 = vmul.f32 %v1411, %v1413
  %v1415 = vadd.f32 %v1411, %v1414
  %vm1416 = vweird.f32 %v1410
  %vm1417 = vweird.f32 %v1411
  %vm1418 = vmor %vm1416, %vm1417
  %v1419 = vsel %vm1418, %v1411, %v1415
  %v1420 = vand.u32 2147483647, %v1410
  %vm1421 = vcmp.eq.f32.partialorder %v1420, 8.507059e+37
  %v1422 = vand.u32 %v1410, 2147483648
  %v1423 = vor.u32 1.1754944e-38, %v1422
  %v1424 = vsel %vm1421, %v1423, %v1419
  %v1425 = vmul.f32 %v1400, %v1424
  %v1426 = vmin.f32 %v1425, 1.0
  %v1427 = vmax.f32 %v1426, -1.0
  %v1428 = vmul.f32 %v983, %v983
  %v1429 = vmin.f32 16.0, %v1428
  %v1430 = vmul.f32 %v1429, 2.1237322e-06
  %v1431 = vadd.f32 %v1430, 0.00028619796
  %v1432 = vmul.f32 %v1429, %v1431
  %v1433 = vadd.f32 %v1432, 0.0036580483
  %v1434 = vmul.f32 %v1429, %v1433
  %v1435 = vadd.f32 %v1434, 0.05243302
  %v1436 = vmul.f32 %v1429, %v1435
  %v1437 = vadd.f32 %v1436, 0.18741608
  %v1438 = vmul.f32 %v1429, %v1437
  %v1439 = vadd.f32 %v1438, 1.1283791
  %v1440 = vmul.f32 %v983, %v1439
  %v1441 = vmul.f32 %v1429, 3.8918573e-05
  %v1442 = vadd.f32 %v1441, 0.001143296
  %v1443 = vmul.f32 %v1429, %v1442
  %v1444 = vadd.f32 %v1443, 0.014752088
  %v1445 = vmul.f32 %v1429, %v1444
  %v1446 = vadd.f32 %v1445, 0.112945676
  %v1447 = vmul.f32 %v1429, %v1446
  %v1448 = vadd.f32 %v1447, 0.4994258
  %v1449 = vmul.f32 %v1429, %v1448
  %v1450 = vadd.f32 %v1449, 1.0
  %v1451 = vrcp.pop %v1450
  %v1452 = vmul.f32 %v1450, %v1451
  %v1453 = vsub.f32 1.0, %v1452
  %v1454 = vmul.f32 %v1451, %v1453
  %v1455 = vadd.f32 %v1451, %v1454
  %vm1456 = vweird.f32 %v1450
  %vm1457 = vweird.f32 %v1451
  %vm1458 = vmor %vm1456, %vm1457
  %v1459 = vsel %vm1458, %v1451, %v1455
  %v1460 = vand.u32 2147483647, %v1450
  %vm1461 = vcmp.eq.f32.partialorder %v1460, 8.507059e+37
  %v1462 = vand.u32 %v1450, 2147483648
  %v1463 = vor.u32 1.1754944e-38, %v1462
  %v1464 = vsel %vm1461, %v1463, %v1459
  %v1465 = vmul.f32 %v1440, %v1464
  %v1466 = vmin.f32 %v1465, 1.0
  %v1467 = vmax.f32 %v1466, -1.0
  %v1468 = vmul.f32 %v984, %v984
  %v1469 = vmin.f32 16.0, %v1468
  %v1470 = vmul.f32 %v1469, 2.1237322e-06
  %v1471 = vadd.f32 %v1470, 0.00028619796
  %v1472 = vmul.f32 %v1469, %v1471
  %v1473 = vadd.f32 %v1472, 0.0036580483
  %v1474 = vmul.f32 %v1469, %v1473
  %v1475 = vadd.f32 %v1474, 0.05243302
  %v1476 = vmul.f32 %v1469, %v1475
  %v1477 = vadd.f32 %v1476, 0.18741608
  %v1478 = vmul.f32 %v1469, %v1477
  %v1479 = vadd.f32 %v1478, 1.1283791
  %v1480 = vmul.f32 %v984, %v1479
  %v1481 = vmul.f32 %v1469, 3.8918573e-05
  %v1482 = vadd.f32 %v1481, 0.001143296
  %v1483 = vmul.f32 %v1469, %v1482
  %v1484 = vadd.f32 %v1483, 0.014752088
  %v1485 = vmul.f32 %v1469, %v1484
  %v1486 = vadd.f32 %v1485, 0.112945676
  %v1487 = vmul.f32 %v1469, %v1486
  %v1488 = vadd.f32 %v1487, 0.4994258
  %v1489 = vmul.f32 %v1469, %v1488
  %v1490 = vadd.f32 %v1489, 1.0
  %v1491 = vrcp.pop %v1490
  %v1492 = vmul.f32 %v1490, %v1491
  %v1493 = vsub.f32 1.0, %v1492
  %v1494 = vmul.f32 %v1491, %v1493
  %v1495 = vadd.f32 %v1491, %v1494
  %vm1496 = vweird.f32 %v1490
  %vm1497 = vweird.f32 %v1491
  %vm1498 = vmor %vm1496, %vm1497
  %v1499 = vsel %vm1498, %v1491, %v1495
  %v1500 = vand.u32 2147483647, %v1490
  %vm1501 = vcmp.eq.f32.partialorder %v1500, 8.507059e+37
  %v1502 = vand.u32 %v1490, 2147483648
  %v1503 = vor.u32 1.1754944e-38, %v1502
  %v1504 = vsel %vm1501, %v1503, %v1499
  %v1505 = vmul.f32 %v1480, %v1504
  %v1506 = vmin.f32 %v1505, 1.0
  %v1507 = vmax.f32 %v1506, -1.0
  %v1508 = vmul.f32 %v985, %v985
  %v1509 = vmin.f32 16.0, %v1508
  %v1510 = vmul.f32 %v1509, 2.1237322e-06
  %v1511 = vadd.f32 %v1510, 0.00028619796
  %v1512 = vmul.f32 %v1509, %v1511
  %v1513 = vadd.f32 %v1512, 0.0036580483
  %v1514 = vmul.f32 %v1509, %v1513
  %v1515 = vadd.f32 %v1514, 0.05243302
  %v1516 = vmul.f32 %v1509, %v1515
  %v1517 = vadd.f32 %v1516, 0.18741608
  %v1518 = vmul.f32 %v1509, %v1517
  %v1519 = vadd.f32 %v1518, 1.1283791
  %v1520 = vmul.f32 %v985, %v1519
  %v1521 = vmul.f32 %v1509, 3.8918573e-05
  %v1522 = vadd.f32 %v1521, 0.001143296
  %v1523 = vmul.f32 %v1509, %v1522
  %v1524 = vadd.f32 %v1523, 0.014752088
  %v1525 = vmul.f32 %v1509, %v1524
  %v1526 = vadd.f32 %v1525, 0.112945676
  %v1527 = vmul.f32 %v1509, %v1526
  %v1528 = vadd.f32 %v1527, 0.4994258
  %v1529 = vmul.f32 %v1509, %v1528
  %v1530 = vadd.f32 %v1529, 1.0
  %v1531 = vrcp.pop %v1530
  %v1532 = vmul.f32 %v1530, %v1531
  %v1533 = vsub.f32 1.0, %v1532
  %v1534 = vmul.f32 %v1531, %v1533
  %v1535 = vadd.f32 %v1531, %v1534
  %vm1536 = vweird.f32 %v1530
  %vm1537 = vweird.f32 %v1531
  %vm1538 = vmor %vm1536, %vm1537
  %v1539 = vsel %vm1538, %v1531, %v1535
  %v1540 = vand.u32 2147483647, %v1530
  %vm1541 = vcmp.eq.f32.partialorder %v1540, 8.507059e+37
  %v1542 = vand.u32 %v1530, 2147483648
  %v1543 = vor.u32 1.1754944e-38, %v1542
  %v1544 = vsel %vm1541, %v1543, %v1539
  %v1545 = vmul.f32 %v1520, %v1544
  %v1546 = vmin.f32 %v1545, 1.0
  %v1547 = vmax.f32 %v1546, -1.0
  %v1548 = vmul.f32 %v986, %v986
  %v1549 = vmin.f32 16.0, %v1548
  %v1550 = vmul.f32 %v1549, 2.1237322e-06
  %v1551 = vadd.f32 %v1550, 0.00028619796
  %v1552 = vmul.f32 %v1549, %v1551
  %v1553 = vadd.f32 %v1552, 0.0036580483
  %v1554 = vmul.f32 %v1549, %v1553
  %v1555 = vadd.f32 %v1554, 0.05243302
  %v1556 = vmul.f32 %v1549, %v1555
  %v1557 = vadd.f32 %v1556, 0.18741608
  %v1558 = vmul.f32 %v1549, %v1557
  %v1559 = vadd.f32 %v1558, 1.1283791
  %v1560 = vmul.f32 %v986, %v1559
  %v1561 = vmul.f32 %v1549, 3.8918573e-05
  %v1562 = vadd.f32 %v1561, 0.001143296
  %v1563 = vmul.f32 %v1549, %v1562
  %v1564 = vadd.f32 %v1563, 0.014752088
  %v1565 = vmul.f32 %v1549, %v1564
  %v1566 = vadd.f32 %v1565, 0.112945676
  %v1567 = vmul.f32 %v1549, %v1566
  %v1568 = vadd.f32 %v1567, 0.4994258
  %v1569 = vmul.f32 %v1549, %v1568
  %v1570 = vadd.f32 %v1569, 1.0
  %v1571 = vrcp.pop %v1570
  %v1572 = vmul.f32 %v1570, %v1571
  %v1573 = vsub.f32 1.0, %v1572
  %v1574 = vmul.f32 %v1571, %v1573
  %v1575 = vadd.f32 %v1571, %v1574
  %vm1576 = vweird.f32 %v1570
  %vm1577 = vweird.f32 %v1571
  %vm1578 = vmor %vm1576, %vm1577
  %v1579 = vsel %vm1578, %v1571, %v1575
  %v1580 = vand.u32 2147483647, %v1570
  %vm1581 = vcmp.eq.f32.partialorder %v1580, 8.507059e+37
  %v1582 = vand.u32 %v1570, 2147483648
  %v1583 = vor.u32 1.1754944e-38, %v1582
  %v1584 = vsel %vm1581, %v1583, %v1579
  %v1585 = vmul.f32 %v1560, %v1584
  %v1586 = vmin.f32 %v1585, 1.0
  %v1587 = vmax.f32 %v1586, -1.0
  %v1588 = vmul.f32 %v987, %v987
  %v1589 = vmin.f32 16.0, %v1588
  %v1590 = vmul.f32 %v1589, 2.1237322e-06
  %v1591 = vadd.f32 %v1590, 0.00028619796
  %v1592 = vmul.f32 %v1589, %v1591
  %v1593 = vadd.f32 %v1592, 0.0036580483
  %v1594 = vmul.f32 %v1589, %v1593
  %v1595 = vadd.f32 %v1594, 0.05243302
  %v1596 = vmul.f32 %v1589, %v1595
  %v1597 = vadd.f32 %v1596, 0.18741608
  %v1598 = vmul.f32 %v1589, %v1597
  %v1599 = vadd.f32 %v1598, 1.1283791
  %v1600 = vmul.f32 %v987, %v1599
  %v1601 = vmul.f32 %v1589, 3.8918573e-05
  %v1602 = vadd.f32 %v1601, 0.001143296
  %v1603 = vmul.f32 %v1589, %v1602
  %v1604 = vadd.f32 %v1603, 0.014752088
  %v1605 = vmul.f32 %v1589, %v1604
  %v1606 = vadd.f32 %v1605, 0.112945676
  %v1607 = vmul.f32 %v1589, %v1606
  %v1608 = vadd.f32 %v1607, 0.4994258
  %v1609 = vmul.f32 %v1589, %v1608
  %v1610 = vadd.f32 %v1609, 1.0
  %v1611 = vrcp.pop %v1610
  %v1612 = vmul.f32 %v1610, %v1611
  %v1613 = vsub.f32 1.0, %v1612
  %v1614 = vmul.f32 %v1611, %v1613
  %v1615 = vadd.f32 %v1611, %v1614
  %vm1616 = vweird.f32 %v1610
  %vm1617 = vweird.f32 %v1611
  %vm1618 = vmor %vm1616, %vm1617
  %v1619 = vsel %vm1618, %v1611, %v1615
  %v1620 = vand.u32 2147483647, %v1610
  %vm1621 = vcmp.eq.f32.partialorder %v1620, 8.507059e+37
  %v1622 = vand.u32 %v1610, 2147483648
  %v1623 = vor.u32 1.1754944e-38, %v1622
  %v1624 = vsel %vm1621, %v1623, %v1619
  %v1625 = vmul.f32 %v1600, %v1624
  %v1626 = vmin.f32 %v1625, 1.0
  %v1627 = vmax.f32 %v1626, -1.0
  %v1628 = vadd.f32 %v1027, 1.0
  %v1629 = vadd.f32 %v1067, 1.0
  %v1630 = vadd.f32 %v1107, 1.0
  %v1631 = vadd.f32 %v1147, 1.0
  %v1632 = vadd.f32 %v1187, 1.0
  %v1633 = vadd.f32 %v1227, 1.0
  %v1634 = vadd.f32 %v1267, 1.0
  %v1635 = vadd.f32 %v1307, 1.0
  %v1636 = vadd.f32 %v1347, 1.0
  %v1637 = vadd.f32 %v1387, 1.0
  %v1638 = vadd.f32 %v1427, 1.0
  %v1639 = vadd.f32 %v1467, 1.0
  %v1640 = vadd.f32 %v1507, 1.0
  %v1641 = vadd.f32 %v1547, 1.0
  %v1642 = vadd.f32 %v1587, 1.0
  %v1643 = vadd.f32 %v1627, 1.0
  %v1644 = vmul.f32 %v956, %v1628
  %v1645 = vmul.f32 %v957, %v1629
  %v1646 = vmul.f32 %v958, %v1630
  %v1647 = vmul.f32 %v959, %v1631
  %v1648 = vmul.f32 %v960, %v1632
  %v1649 = vmul.f32 %v961, %v1633
  %v1650 = vmul.f32 %v962, %v1634
  %v1651 = vmul.f32 %v963, %v1635
  %v1652 = vmul.f32 %v964, %v1636
  %v1653 = vmul.f32 %v965, %v1637
  %v1654 = vmul.f32 %v966, %v1638
  %v1655 = vmul.f32 %v967, %v1639
  %v1656 = vmul.f32 %v968, %v1640
  %v1657 = vmul.f32 %v969, %v1641
  %v1658 = vmul.f32 %v970, %v1642
  %v1659 = vmul.f32 %v971, %v1643
  %v1661 = vperm.slane %v441, 0
  %vm1663 = vcmask 195584
  %v1665 = vsel %vm1663, %v1644, 0
  %v1668 = vsel %vm1663, %v1645, 0
  %v1671 = vsel %vm1663, %v1646, 0
  %v1674 = vsel %vm1663, %v1647, 0
  %v1677 = vsel %vm1663, %v1648, 0
  %v1680 = vsel %vm1663, %v1649, 0
  %v1683 = vsel %vm1663, %v1650, 0
  %v1686 = vsel %vm1663, %v1651, 0
  %v1689 = vsel %vm1663, %v1652, 0
  %v1692 = vsel %vm1663, %v1653, 0
  %v1695 = vsel %vm1663, %v1654, 0
  %v1698 = vsel %vm1663, %v1655, 0
  %v1701 = vsel %vm1663, %v1656, 0
  %v1704 = vsel %vm1663, %v1657, 0
  %v1707 = vsel %vm1663, %v1658, 0
  %v1710 = vsel %vm1663, %v1659, 0
  %1712 = vmatpush.msra.mxu0 0.0
  %1713 = vmatpush.msra.mxu0 0.0
  %1714 = vmatpush.msra.mxu0 0.0
  %1715 = vmatpush.msra.mxu0 0.0
  %1716 = vmatpush.msra.mxu0 0.0
  %1717 = vmatpush.msra.mxu0 0.0
  %1718 = vmatpush.msra.mxu0 0.0
  %1719 = vmatpush.msra.mxu0 0.0
  %1720 = vmatpush.msra.mxu0 0.0
  %1721 = vmatpush.msra.mxu0 0.0
  %1722 = vmatpush.msra.mxu0 0.0
  %1723 = vmatpush.msra.mxu0 0.0
  %1724 = vmatpush.msra.mxu0 0.0
  %1725 = vmatpush.msra.mxu0 %v440
  %1726 = vmatpush.msra.mxu0 %v439
  %1727 = vmatpush.msra.mxu0 %v438
  %1728 = vmatmul.f32.gmra.mxu0 %v1665
  %v1729 = vpop.f32.mrf.mxu0
  %v1730 = vadd.f32 %v1661, %v1729
  %1731 = vmatmul.f32.gmra.mxu0 %v1668
  %v1732 = vpop.f32.mrf.mxu0
  %v1733 = vadd.f32 %v1661, %v1732
  %1734 = vmatmul.f32.gmra.mxu0 %v1671
  %v1735 = vpop.f32.mrf.mxu0
  %v1736 = vadd.f32 %v1661, %v1735
  %1737 = vmatmul.f32.gmra.mxu0 %v1674
  %v1738 = vpop.f32.mrf.mxu0
  %v1739 = vadd.f32 %v1661, %v1738
  %1740 = vmatmul.f32.gmra.mxu0 %v1677
  %v1741 = vpop.f32.mrf.mxu0
  %v1742 = vadd.f32 %v1661, %v1741
  %1743 = vmatmul.f32.gmra.mxu0 %v1680
  %v1744 = vpop.f32.mrf.mxu0
  %v1745 = vadd.f32 %v1661, %v1744
  %1746 = vmatmul.f32.gmra.mxu0 %v1683
  %v1747 = vpop.f32.mrf.mxu0
  %v1748 = vadd.f32 %v1661, %v1747
  %1749 = vmatmul.f32.gmra.mxu0 %v1686
  %v1750 = vpop.f32.mrf.mxu0
  %v1751 = vadd.f32 %v1661, %v1750
  %1752 = vmatmul.f32.gmra.mxu0 %v1689
  %v1753 = vpop.f32.mrf.mxu0
  %v1754 = vadd.f32 %v1661, %v1753
  %1755 = vmatmul.f32.gmra.mxu0 %v1692
  %v1756 = vpop.f32.mrf.mxu0
  %v1757 = vadd.f32 %v1661, %v1756
  %1758 = vmatmul.f32.gmra.mxu0 %v1695
  %v1759 = vpop.f32.mrf.mxu0
  %v1760 = vadd.f32 %v1661, %v1759
  %1761 = vmatmul.f32.gmra.mxu0 %v1698
  %v1762 = vpop.f32.mrf.mxu0
  %v1763 = vadd.f32 %v1661, %v1762
  %1764 = vmatmul.f32.gmra.mxu0 %v1701
  %v1765 = vpop.f32.mrf.mxu0
  %v1766 = vadd.f32 %v1661, %v1765
  %1767 = vmatmul.f32.gmra.mxu0 %v1704
  %v1768 = vpop.f32.mrf.mxu0
  %v1769 = vadd.f32 %v1661, %v1768
  %1770 = vmatmul.f32.gmra.mxu0 %v1707
  %v1771 = vpop.f32.mrf.mxu0
  %v1772 = vadd.f32 %v1661, %v1771
  %1773 = vmatmul.f32.gmra.mxu0 %v1710
  %v1774 = vpop.f32.mrf.mxu0
  %v1775 = vadd.f32 %v1661, %v1774
  %1776 = vdwg.mxu0
  %v1777 = vadd.f32 %v418, %v1730
  %v1778 = vadd.f32 %v419, %v1733
  %v1779 = vadd.f32 %v420, %v1736
  %v1780 = vadd.f32 %v421, %v1739
  %v1781 = vadd.f32 %v422, %v1742
  %v1782 = vadd.f32 %v423, %v1745
  %v1783 = vadd.f32 %v424, %v1748
  %v1784 = vadd.f32 %v425, %v1751
  %v1785 = vadd.f32 %v426, %v1754
  %v1786 = vadd.f32 %v427, %v1757
  %v1787 = vadd.f32 %v428, %v1760
  %v1788 = vadd.f32 %v429, %v1763
  %v1789 = vadd.f32 %v430, %v1766
  %v1790 = vadd.f32 %v431, %v1769
  %v1791 = vadd.f32 %v432, %v1772
  %v1792 = vadd.f32 %v433, %v1775
  %1793 = vst.msk [vmem:[%s11] sm:$0xff] %vm442, %v1777
  %1794 = vst.msk [vmem:[%s11 + $0x8] sm:$0xff] %vm442, %v1778
  %1795 = vst.msk [vmem:[%s11 + $0x10] sm:$0xff] %vm442, %v1779
  %1796 = vst.msk [vmem:[%s11 + $0x18] sm:$0xff] %vm442, %v1780
  %1797 = vst.msk [vmem:[%s11 + $0x20] sm:$0xff] %vm442, %v1781
  %1798 = vst.msk [vmem:[%s11 + $0x28] sm:$0xff] %vm442, %v1782
  %1799 = vst.msk [vmem:[%s11 + $0x30] sm:$0xff] %vm442, %v1783
  %1800 = vst.msk [vmem:[%s11 + $0x38] sm:$0xff] %vm442, %v1784
  %1801 = vst.msk [vmem:[%s11 + $0x40] sm:$0xff] %vm442, %v1785
  %1802 = vst.msk [vmem:[%s11 + $0x48] sm:$0xff] %vm442, %v1786
  %1803 = vst.msk [vmem:[%s11 + $0x50] sm:$0xff] %vm442, %v1787
  %1804 = vst.msk [vmem:[%s11 + $0x58] sm:$0xff] %vm442, %v1788
  %1805 = vst.msk [vmem:[%s11 + $0x60] sm:$0xff] %vm442, %v1789
  %1806 = vst.msk [vmem:[%s11 + $0x68] sm:$0xff] %vm442, %v1790
  %1807 = vst.msk [vmem:[%s11 + $0x70] sm:$0xff] %vm442, %v1791
  %1808 = vst.msk [vmem:[%s11 + $0x78] sm:$0xff] %vm442, %v1792
  // Predicated region
  $region46: #{tpu_custom_call.1} parent=0 // pred_check
    _
  $region47: #{tpu_custom_call.1} parent=0 // pred_check_branch
    %1810 = sbr.rel (0) target = $region49
  $region48: #{tpu_custom_call.1} parent=0 // pred_region
    _
  $region49: #{tpu_custom_call.1} parent=0 // pred_fallthru
    _
  // Predicated region
  $region50: #{tpu_custom_call.1} parent=0 // pred_check
    _
  $region51: #{tpu_custom_call.1} parent=0 // pred_check_branch
    %1812 = sbr.rel (0) target = $region53
  $region52: #{tpu_custom_call.1} parent=0 // pred_region
    _
  $region53: #{tpu_custom_call.1} parent=0 // pred_fallthru
    _

</llo_original>
